<compile_context>
chip_gen: v5e
topology: v5e:2x2
jax: 0.10.0
libtpu: 0.0.40
codegen_flags: <defaults>
</compile_context>

<pallas_src>
import jax
import jax.numpy as jnp
from jax.experimental import pallas as pl
from jax.experimental.pallas import tpu as pltpu

# --- model config (small, BERT-like) ----------------------------------------
BATCH = 2
SEQ = 8
HIDDEN = 32
HEADS = 2
HEAD_DIM = HIDDEN // HEADS
FFN = 64
VOCAB = 64
LAYERS = 2
EPS = 1e-12
M = BATCH * SEQ
OUT_W = 128              # packed head output: [ logits(64) | det(1) | pad(63) ]
QKV_W = 3 * HEADS * 128  # fused QKV width; each (head, {Q,K,V}) block starts
                         # at its own 128-lane boundary -> all slices are free
NEG = -1e9


# --- single fused Pallas kernel ----------------------------------------------
def _fused_forward_kernel(
    ids_ref, maskv_ref, blockbias_ref,
    tok_ref, pos_ref, eg_ref, eb_ref,
    wqkv_ref, bqkv_ref, wo_ref, bo_ref, ln1g_ref, ln1b_ref,
    w1_ref, b1_ref, w2_ref, b2_ref, ln2g_ref, ln2b_ref,
    mlmw_ref, mlmb_ref, mlng_ref, mlnb_ref,
    hwt_ref, hwh_ref, hb_ref,
    out_ref,
):
    f32 = jnp.float32
    bf16 = jnp.bfloat16

    def layernorm(x, g, b):
        mu = jnp.mean(x, axis=-1, keepdims=True)
        var = jnp.mean((x - mu) ** 2, axis=-1, keepdims=True)
        return (x - mu) * jax.lax.rsqrt(var + EPS) * g + b

    # --- embedding: one-hot gather on the MXU + positional add + LayerNorm ---
    ids = ids_ref[...]                                           # (M, 1) int32
    vocab_iota = jax.lax.broadcasted_iota(jnp.int32, (M, VOCAB), 1)
    onehot = jnp.where(ids == vocab_iota, 1.0, 0.0).astype(bf16)  # (M, VOCAB)
    emb = jnp.dot(onehot, tok_ref[...],
                  preferred_element_type=f32) + pos_ref[...]      # (M, H)
    h = layernorm(emb, eg_ref[...], eb_ref[...])

    # --- attention additive bias, built ONCE (hoisted out of the layer loop):
    #     precomputed block-diagonal (cross-batch) bias + runtime padding bias.
    maskf = maskv_ref[...].astype(f32)                            # (1, M)
    attn_bias = blockbias_ref[...] + (1.0 - maskf) * NEG          # (M, M)

    for l in range(LAYERS):
        # fused QKV projection: one bf16 MXU matmul; all per-head slices below
        # start at 128-lane boundaries (weight is lane-padded at init).
        qkv = jnp.dot(h.astype(bf16), wqkv_ref[l],
                      preferred_element_type=f32) + bqkv_ref[l]   # (M, QKV_W)
        wo_l = wo_ref[l]                                          # (H, H) bf16

        ctx_proj = None
        for hh in range(HEADS):
            q_off = hh * 128
            k_off = (HEADS + hh) * 128
            v_off = (2 * HEADS + hh) * 128
            qh = qkv[:, q_off:q_off + HEAD_DIM].astype(bf16)      # (M, Dh)
            kh = qkv[:, k_off:k_off + HEAD_DIM].astype(bf16)
            vh = qkv[:, v_off:v_off + HEAD_DIM].astype(bf16)

            # scores across ALL rows (both batches) at once; cross-batch and
            # padded-key entries are killed by attn_bias.  1/sqrt(Dh) is
            # already folded into Wq.
            s = jnp.einsum("qd,kd->qk", qh, kh,
                           preferred_element_type=f32) + attn_bias  # (M, M)
            s_max = jnp.max(s, axis=-1, keepdims=True)
            p = jnp.exp(s - s_max)
            denom = jnp.sum(p, axis=-1, keepdims=True)
            p = p * pl.reciprocal(denom, approx=True)               # EUP slot

            ctx_h = jnp.dot(p.astype(bf16), vh,
                            preferred_element_type=f32)             # (M, Dh)
            # per-head half of the output projection (sublane-aligned slice of
            # Wo); summing the halves avoids a lane-axis head concat.
            wo_h = wo_l[hh * HEAD_DIM:(hh + 1) * HEAD_DIM, :]
            part = jnp.dot(ctx_h.astype(bf16), wo_h,
                           preferred_element_type=f32)              # (M, H)
            ctx_proj = part if ctx_proj is None else ctx_proj + part

        attn_out = ctx_proj + bo_ref[l]
        h = layernorm(attn_out + h, ln1g_ref[l], ln1b_ref[l])

        ff = jnp.dot(h.astype(bf16), w1_ref[l],
                     preferred_element_type=f32) + b1_ref[l]
        # TODO(synk): HF BERT uses exact erf GELU; tanh approximation used here.
        ff = jax.nn.gelu(ff, approximate=True)
        ff = jnp.dot(ff.astype(bf16), w2_ref[l],
                     preferred_element_type=f32) + b2_ref[l]
        h = layernorm(ff + h, ln2g_ref[l], ln2b_ref[l])

    # MLM transform head: dense + gelu + LN (no residual)
    t = jnp.dot(h.astype(bf16), mlmw_ref[...],
                preferred_element_type=f32) + mlmb_ref[...]
    t = jax.nn.gelu(t, approximate=True)
    t = layernorm(t, mlng_ref[...], mlnb_ref[...])

    # packed lane-dense head (no lane concat): out = t @ Wt + h @ Wh + b
    #   cols [0, VOCAB)   : tied-decoder MLM logits (from t)
    #   col   VOCAB       : detection logit (from h)
    #   cols (VOCAB, 128) : zero padding
    out = (jnp.dot(t.astype(bf16), hwt_ref[...], preferred_element_type=f32)
           + jnp.dot(h.astype(bf16), hwh_ref[...], preferred_element_type=f32)
           + hb_ref[...])                                          # (M, 128)
    out_ref[...] = out.astype(out_ref.dtype)


# --- parameter init (deterministic, synthetic BERT) ---------------------------
def init_params(key):
    std = 0.02
    bf16 = jnp.bfloat16

    def nrm(k, shape):
        return jax.random.normal(k, shape, jnp.float32) * std

    keys = iter(jax.random.split(key, 64))
    scale = 1.0 / (HEAD_DIM ** 0.5)

    tok_emb = nrm(next(keys), (VOCAB, HIDDEN))
    pos_emb = nrm(next(keys), (SEQ, HIDDEN))
    pos_tiled = jnp.tile(pos_emb, (BATCH, 1))          # (M, H), precomputed once

    # constant block-diagonal bias: 0 within a batch, -1e9 across batches
    row_b = jnp.repeat(jnp.arange(BATCH), SEQ)          # (M,)
    blockbias = jnp.where(row_b[:, None] == row_b[None, :], 0.0, NEG
                          ).astype(jnp.float32)         # (M, M)

    wqkv, bqkv, wo, bo = [], [], [], []
    ln1_g, ln1_b, ln2_g, ln2_b = [], [], [], []
    w1, b1, w2, b2 = [], [], [], []
    for _ in range(LAYERS):
        wq = nrm(next(keys), (HIDDEN, HIDDEN)) * scale   # fold softmax scale
        wk = nrm(next(keys), (HIDDEN, HIDDEN))
        wv = nrm(next(keys), (HIDDEN, HIDDEN))
        # lane-padded fused QKV weight: block b*128 holds
        #   b in [0,HEADS)        -> Q head b
        #   b in [HEADS,2*HEADS)  -> K head (b-HEADS)
        #   b in [2*HEADS,3*HEADS)-> V head (b-2*HEADS)
        wqkv_l = jnp.zeros((HIDDEN, QKV_W), jnp.float32)
        for hh in range(HEADS):
            c = hh * HEAD_DIM
            wqkv_l = wqkv_l.at[:, hh * 128: hh * 128 + HEAD_DIM
                               ].set(wq[:, c:c + HEAD_DIM])
            wqkv_l = wqkv_l.at[:, (HEADS + hh) * 128:(HEADS + hh) * 128 + HEAD_DIM
                               ].set(wk[:, c:c + HEAD_DIM])
            wqkv_l = wqkv_l.at[:, (2 * HEADS + hh) * 128:(2 * HEADS + hh) * 128 + HEAD_DIM
                               ].set(wv[:, c:c + HEAD_DIM])
        wqkv.append(wqkv_l)
        bqkv.append(jnp.zeros((1, QKV_W), jnp.float32))
        wo.append(nrm(next(keys), (HIDDEN, HIDDEN)))
        bo.append(jnp.zeros((1, HIDDEN), jnp.float32))
        ln1_g.append(jnp.ones((1, HIDDEN), jnp.float32))
        ln1_b.append(jnp.zeros((1, HIDDEN), jnp.float32))
        w1.append(nrm(next(keys), (HIDDEN, FFN)))
        b1.append(jnp.zeros((1, FFN), jnp.float32))
        w2.append(nrm(next(keys), (FFN, HIDDEN)))
        b2.append(jnp.zeros((1, HIDDEN), jnp.float32))
        ln2_g.append(jnp.ones((1, HIDDEN), jnp.float32))
        ln2_b.append(jnp.zeros((1, HIDDEN), jnp.float32))

    # heads
    det_w = nrm(next(keys), (HIDDEN, 1))
    det_b = jnp.zeros((1,), jnp.float32)
    mlm_w = nrm(next(keys), (HIDDEN, HIDDEN))
    mlm_bias = jnp.zeros((VOCAB,), jnp.float32)

    # packed lane-dense head, split in two halves (no in-kernel concat):
    #   out = t @ head_w_t + h @ head_w_h + head_b
    head_w_t = jnp.zeros((HIDDEN, OUT_W), jnp.float32)
    head_w_t = head_w_t.at[:, :VOCAB].set(tok_emb.T)     # tied decoder, baked
    head_w_h = jnp.zeros((HIDDEN, OUT_W), jnp.float32)
    head_w_h = head_w_h.at[:, VOCAB].set(det_w[:, 0])    # detection column
    head_b = jnp.zeros((1, OUT_W), jnp.float32)
    head_b = head_b.at[0, :VOCAB].set(mlm_bias)
    head_b = head_b.at[0, VOCAB].set(det_b[0])

    return {
        "tok_emb": tok_emb.astype(bf16),                 # MXU gather table
        "pos_tiled": pos_tiled,
        "blockbias": blockbias,
        "emb_ln_g": jnp.ones((1, HIDDEN), jnp.float32),
        "emb_ln_b": jnp.zeros((1, HIDDEN), jnp.float32),
        # stacked per-layer params; MXU weights stored bf16, VPU params f32
        "wqkv": jnp.stack(wqkv).astype(bf16), "bqkv": jnp.stack(bqkv),
        "wo": jnp.stack(wo).astype(bf16), "bo": jnp.stack(bo),
        "ln1_g": jnp.stack(ln1_g), "ln1_b": jnp.stack(ln1_b),
        "w1": jnp.stack(w1).astype(bf16), "b1": jnp.stack(b1),
        "w2": jnp.stack(w2).astype(bf16), "b2": jnp.stack(b2),
        "ln2_g": jnp.stack(ln2_g), "ln2_b": jnp.stack(ln2_b),
        "mlm_w": mlm_w.astype(bf16),
        "mlm_b": jnp.zeros((1, HIDDEN), jnp.float32),
        "mlm_ln_g": jnp.ones((1, HIDDEN), jnp.float32),
        "mlm_ln_b": jnp.zeros((1, HIDDEN), jnp.float32),
        "head_w_t": head_w_t.astype(bf16),
        "head_w_h": head_w_h.astype(bf16),
        "head_b": head_b,
    }


# --- forward pass -------------------------------------------------------------
@jax.jit
def csc_forward(params, input_ids, attention_mask):
    B, S = input_ids.shape
    m = B * S

    # only bitcast-level reshapes here; gather, pos add and masking are fused
    # into the kernel (removes the per-op XLA dispatch overhead).
    ids_col = input_ids.reshape(m, 1).astype(jnp.int32)       # (M, 1)
    mask_row = attention_mask.reshape(1, m).astype(jnp.int32)  # (1, M)

    out = pl.pallas_call(
        _fused_forward_kernel,
        out_shape=jax.ShapeDtypeStruct((m, OUT_W), jnp.float32),
        compiler_params=pltpu.CompilerParams(vmem_limit_bytes=4 * 1024 * 1024),
    )(
        ids_col, mask_row, params["blockbias"],
        params["tok_emb"], params["pos_tiled"],
        params["emb_ln_g"], params["emb_ln_b"],
        params["wqkv"], params["bqkv"], params["wo"], params["bo"],
        params["ln1_g"], params["ln1_b"],
        params["w1"], params["b1"], params["w2"], params["b2"],
        params["ln2_g"], params["ln2_b"],
        params["mlm_w"], params["mlm_b"], params["mlm_ln_g"], params["mlm_ln_b"],
        params["head_w_t"], params["head_w_h"], params["head_b"],
    )

    logits = out[:, :VOCAB].reshape(B, S, VOCAB)
    prob = out[:, VOCAB:VOCAB + 1].reshape(B, S, 1)   # raw (no sigmoid), as in reference
    return prob, logits


if __name__ == "__main__":
    key = jax.random.PRNGKey(0)
    k_param, k_ids = jax.random.split(key)

    params = init_params(k_param)
    input_ids = jax.random.randint(k_ids, (BATCH, SEQ), 1, VOCAB, dtype=jnp.int32)
    # emulate tokenizer padding: last 2 positions of the second sample are pads
    attention_mask = jnp.ones((BATCH, SEQ), jnp.int32).at[1, -2:].set(0)
    input_ids = input_ids.at[1, -2:].set(0)

    prob, logits = csc_forward(params, input_ids, attention_mask)
    jax.block_until_ready((prob, logits))

    assert prob.shape == (BATCH, SEQ, 1)
    assert logits.shape == (BATCH, SEQ, VOCAB)
    assert bool(jnp.all(jnp.isfinite(prob))) and bool(jnp.all(jnp.isfinite(logits)))
    print("KERNEL_OK")
</pallas_src>

<mosaic_0001>
module attributes {stable_mosaic.version = 11 : i64} {
  func.func @_fused_forward_kernel(%arg0: memref<16x1xi32, #tpu.memory_space<vmem>>, %arg1: memref<1x16xi32, #tpu.memory_space<vmem>>, %arg2: memref<16x16xf32, #tpu.memory_space<vmem>>, %arg3: memref<64x32xbf16, #tpu.memory_space<vmem>>, %arg4: memref<16x32xf32, #tpu.memory_space<vmem>>, %arg5: memref<1x32xf32, #tpu.memory_space<vmem>>, %arg6: memref<1x32xf32, #tpu.memory_space<vmem>>, %arg7: memref<2x32x768xbf16, #tpu.memory_space<vmem>>, %arg8: memref<2x1x768xf32, #tpu.memory_space<vmem>>, %arg9: memref<2x32x32xbf16, #tpu.memory_space<vmem>>, %arg10: memref<2x1x32xf32, #tpu.memory_space<vmem>>, %arg11: memref<2x1x32xf32, #tpu.memory_space<vmem>>, %arg12: memref<2x1x32xf32, #tpu.memory_space<vmem>>, %arg13: memref<2x32x64xbf16, #tpu.memory_space<vmem>>, %arg14: memref<2x1x64xf32, #tpu.memory_space<vmem>>, %arg15: memref<2x64x32xbf16, #tpu.memory_space<vmem>>, %arg16: memref<2x1x32xf32, #tpu.memory_space<vmem>>, %arg17: memref<2x1x32xf32, #tpu.memory_space<vmem>>, %arg18: memref<2x1x32xf32, #tpu.memory_space<vmem>>, %arg19: memref<32x32xbf16, #tpu.memory_space<vmem>>, %arg20: memref<1x32xf32, #tpu.memory_space<vmem>>, %arg21: memref<1x32xf32, #tpu.memory_space<vmem>>, %arg22: memref<1x32xf32, #tpu.memory_space<vmem>>, %arg23: memref<32x128xbf16, #tpu.memory_space<vmem>>, %arg24: memref<32x128xbf16, #tpu.memory_space<vmem>>, %arg25: memref<1x128xf32, #tpu.memory_space<vmem>>, %arg26: memref<16x128xf32, #tpu.memory_space<vmem>>) attributes {dimension_semantics = [], scalar_prefetch = 0 : i64, scratch_operands = 0 : i64, tpu.core_type = #tpu.core_type<tc>} {
    %c0 = arith.constant 0 : index
    %c0_0 = arith.constant 0 : index
    %0 = vector.load %arg0[%c0, %c0_0] : memref<16x1xi32, #tpu.memory_space<vmem>>, vector<16x1xi32>
    %1 = tpu.iota {dimensions = array<i32: 1>} : vector<16x64xi32>
    %2 = vector.broadcast %0 : vector<16x1xi32> to vector<16x64xi32>
    %3 = arith.cmpi eq, %2, %1 : vector<16x64xi32>
    %cst = arith.constant 1.000000e+00 : f32
    %cst_1 = arith.constant 0.000000e+00 : f32
    %4 = vector.broadcast %cst : f32 to vector<16x64xf32>
    %5 = vector.broadcast %cst_1 : f32 to vector<16x64xf32>
    %6 = arith.select %3, %4, %5 : vector<16x64xi1>, vector<16x64xf32>
    %7 = arith.truncf %6 : vector<16x64xf32> to vector<16x64xbf16>
    %c0_2 = arith.constant 0 : index
    %c0_3 = arith.constant 0 : index
    %8 = vector.load %arg3[%c0_2, %c0_3] : memref<64x32xbf16, #tpu.memory_space<vmem>>, vector<64x32xbf16>
    %cst_4 = arith.constant dense<0.000000e+00> : vector<16x32xf32>
    %9 = tpu.matmul %7, %8, %cst_4 {dimension_numbers = #tpu.dot_dimension_numbers<[1], [0], [0], [1], [0, 0, 1, 1], [], []>} : vector<16x64xbf16>, vector<64x32xbf16>, vector<16x32xf32> -> vector<16x32xf32>
    %c0_5 = arith.constant 0 : index
    %c0_6 = arith.constant 0 : index
    %10 = vector.load %arg4[%c0_5, %c0_6] : memref<16x32xf32, #tpu.memory_space<vmem>>, vector<16x32xf32>
    %11 = arith.addf %9, %10 : vector<16x32xf32>
    %c0_7 = arith.constant 0 : index
    %c0_8 = arith.constant 0 : index
    %12 = vector.load %arg5[%c0_7, %c0_8] : memref<1x32xf32, #tpu.memory_space<vmem>>, vector<1x32xf32>
    %c0_9 = arith.constant 0 : index
    %c0_10 = arith.constant 0 : index
    %13 = vector.load %arg6[%c0_9, %c0_10] : memref<1x32xf32, #tpu.memory_space<vmem>>, vector<1x32xf32>
    %cst_11 = arith.constant dense<0.000000e+00> : vector<16xf32>
    %14 = vector.multi_reduction <add>, %11, %cst_11 [1] : vector<16x32xf32> to vector<16xf32>
    %15 = vector.shape_cast %14 : vector<16xf32> to vector<16x1xf32>
    %cst_12 = arith.constant 3.200000e+01 : f32
    %16 = vector.broadcast %cst_12 : f32 to vector<16x1xf32>
    %17 = arith.divf %15, %16 : vector<16x1xf32>
    %18 = vector.broadcast %17 : vector<16x1xf32> to vector<16x32xf32>
    %19 = arith.subf %11, %18 : vector<16x32xf32>
    %20 = arith.mulf %19, %19 : vector<16x32xf32>
    %cst_13 = arith.constant dense<0.000000e+00> : vector<16xf32>
    %21 = vector.multi_reduction <add>, %20, %cst_13 [1] : vector<16x32xf32> to vector<16xf32>
    %22 = vector.shape_cast %21 : vector<16xf32> to vector<16x1xf32>
    %cst_14 = arith.constant 3.200000e+01 : f32
    %23 = vector.broadcast %cst_14 : f32 to vector<16x1xf32>
    %24 = arith.divf %22, %23 : vector<16x1xf32>
    %25 = vector.broadcast %17 : vector<16x1xf32> to vector<16x32xf32>
    %26 = arith.subf %11, %25 : vector<16x32xf32>
    %cst_15 = arith.constant 9.99999996E-13 : f32
    %27 = vector.broadcast %cst_15 : f32 to vector<16x1xf32>
    %28 = arith.addf %24, %27 : vector<16x1xf32>
    %29 = math.rsqrt %28 : vector<16x1xf32>
    %30 = vector.broadcast %29 : vector<16x1xf32> to vector<16x32xf32>
    %31 = arith.mulf %26, %30 : vector<16x32xf32>
    %32 = vector.broadcast %12 : vector<1x32xf32> to vector<16x32xf32>
    %33 = arith.mulf %31, %32 : vector<16x32xf32>
    %34 = vector.broadcast %13 : vector<1x32xf32> to vector<16x32xf32>
    %35 = arith.addf %33, %34 : vector<16x32xf32>
    %c0_16 = arith.constant 0 : index
    %c0_17 = arith.constant 0 : index
    %36 = vector.load %arg1[%c0_16, %c0_17] : memref<1x16xi32, #tpu.memory_space<vmem>>, vector<1x16xi32>
    %37 = arith.sitofp %36 : vector<1x16xi32> to vector<1x16xf32>
    %c0_18 = arith.constant 0 : index
    %c0_19 = arith.constant 0 : index
    %38 = vector.load %arg2[%c0_18, %c0_19] : memref<16x16xf32, #tpu.memory_space<vmem>>, vector<16x16xf32>
    %cst_20 = arith.constant 1.000000e+00 : f32
    %39 = vector.broadcast %cst_20 : f32 to vector<1x16xf32>
    %40 = arith.subf %39, %37 : vector<1x16xf32>
    %cst_21 = arith.constant -1.000000e+09 : f32
    %41 = vector.broadcast %cst_21 : f32 to vector<1x16xf32>
    %42 = arith.mulf %40, %41 : vector<1x16xf32>
    %43 = vector.broadcast %42 : vector<1x16xf32> to vector<16x16xf32>
    %44 = arith.addf %38, %43 : vector<16x16xf32>
    %45 = arith.truncf %35 : vector<16x32xf32> to vector<16x32xbf16>
    %c0_22 = arith.constant 0 : index
    %c0_23 = arith.constant 0 : index
    %c0_24 = arith.constant 0 : index
    %46 = vector.load %arg7[%c0_22, %c0_23, %c0_24] : memref<2x32x768xbf16, #tpu.memory_space<vmem>>, vector<1x32x768xbf16>
    %47 = vector.shape_cast %46 : vector<1x32x768xbf16> to vector<32x768xbf16>
    %cst_25 = arith.constant dense<0.000000e+00> : vector<16x768xf32>
    %48 = tpu.matmul %45, %47, %cst_25 {dimension_numbers = #tpu.dot_dimension_numbers<[1], [0], [0], [1], [0, 0, 1, 1], [], []>} : vector<16x32xbf16>, vector<32x768xbf16>, vector<16x768xf32> -> vector<16x768xf32>
    %c0_26 = arith.constant 0 : index
    %c0_27 = arith.constant 0 : index
    %c0_28 = arith.constant 0 : index
    %49 = vector.load %arg8[%c0_26, %c0_27, %c0_28] : memref<2x1x768xf32, #tpu.memory_space<vmem>>, vector<1x1x768xf32>
    %50 = vector.shape_cast %49 : vector<1x1x768xf32> to vector<1x768xf32>
    %51 = vector.broadcast %50 : vector<1x768xf32> to vector<16x768xf32>
    %52 = arith.addf %48, %51 : vector<16x768xf32>
    %c0_29 = arith.constant 0 : index
    %c0_30 = arith.constant 0 : index
    %c0_31 = arith.constant 0 : index
    %53 = vector.load %arg9[%c0_29, %c0_30, %c0_31] : memref<2x32x32xbf16, #tpu.memory_space<vmem>>, vector<1x32x32xbf16>
    %54 = vector.shape_cast %53 : vector<1x32x32xbf16> to vector<32x32xbf16>
    %55 = vector.extract_strided_slice %52 {offsets = [0, 0], sizes = [16, 16], strides = [1, 1]} : vector<16x768xf32> to vector<16x16xf32>
    %56 = arith.truncf %55 : vector<16x16xf32> to vector<16x16xbf16>
    %57 = vector.extract_strided_slice %52 {offsets = [0, 256], sizes = [16, 16], strides = [1, 1]} : vector<16x768xf32> to vector<16x16xf32>
    %58 = arith.truncf %57 : vector<16x16xf32> to vector<16x16xbf16>
    %59 = vector.extract_strided_slice %52 {offsets = [0, 512], sizes = [16, 16], strides = [1, 1]} : vector<16x768xf32> to vector<16x16xf32>
    %60 = arith.truncf %59 : vector<16x16xf32> to vector<16x16xbf16>
    "tpu.trace_start"() <{level = 10 : i32, message = "qd,kd->qk"}> : () -> ()
    %cst_32 = arith.constant dense<0.000000e+00> : vector<16x16xf32>
    %61 = tpu.matmul %56, %58, %cst_32 {dimension_numbers = #tpu.dot_dimension_numbers<[1], [1], [0], [0], [0, 0, 1, 0], [], []>} : vector<16x16xbf16>, vector<16x16xbf16>, vector<16x16xf32> -> vector<16x16xf32>
    "tpu.trace_stop"() : () -> ()
    %62 = arith.addf %61, %44 : vector<16x16xf32>
    %cst_33 = arith.constant dense<0xFF800000> : vector<16xf32>
    %63 = vector.multi_reduction <maximumf>, %62, %cst_33 [1] : vector<16x16xf32> to vector<16xf32>
    %64 = vector.shape_cast %63 : vector<16xf32> to vector<16x1xf32>
    %65 = vector.broadcast %64 : vector<16x1xf32> to vector<16x16xf32>
    %66 = arith.subf %62, %65 : vector<16x16xf32>
    %67 = math.exp %66 : vector<16x16xf32>
    %cst_34 = arith.constant dense<0.000000e+00> : vector<16xf32>
    %68 = vector.multi_reduction <add>, %67, %cst_34 [1] : vector<16x16xf32> to vector<16xf32>
    %69 = vector.shape_cast %68 : vector<16xf32> to vector<16x1xf32>
    %70 = tpu.reciprocal %69 {approx = true} : vector<16x1xf32> -> vector<16x1xf32>
    %71 = vector.broadcast %70 : vector<16x1xf32> to vector<16x16xf32>
    %72 = arith.mulf %67, %71 : vector<16x16xf32>
    %73 = arith.truncf %72 : vector<16x16xf32> to vector<16x16xbf16>
    %cst_35 = arith.constant dense<0.000000e+00> : vector<16x16xf32>
    %74 = tpu.matmul %73, %60, %cst_35 {dimension_numbers = #tpu.dot_dimension_numbers<[1], [0], [0], [1], [0, 0, 1, 1], [], []>} : vector<16x16xbf16>, vector<16x16xbf16>, vector<16x16xf32> -> vector<16x16xf32>
    %75 = vector.extract_strided_slice %54 {offsets = [0, 0], sizes = [16, 32], strides = [1, 1]} : vector<32x32xbf16> to vector<16x32xbf16>
    %76 = arith.truncf %74 : vector<16x16xf32> to vector<16x16xbf16>
    %cst_36 = arith.constant dense<0.000000e+00> : vector<16x32xf32>
    %77 = tpu.matmul %76, %75, %cst_36 {dimension_numbers = #tpu.dot_dimension_numbers<[1], [0], [0], [1], [0, 0, 1, 1], [], []>} : vector<16x16xbf16>, vector<16x32xbf16>, vector<16x32xf32> -> vector<16x32xf32>
    %78 = vector.extract_strided_slice %52 {offsets = [0, 128], sizes = [16, 16], strides = [1, 1]} : vector<16x768xf32> to vector<16x16xf32>
    %79 = arith.truncf %78 : vector<16x16xf32> to vector<16x16xbf16>
    %80 = vector.extract_strided_slice %52 {offsets = [0, 384], sizes = [16, 16], strides = [1, 1]} : vector<16x768xf32> to vector<16x16xf32>
    %81 = arith.truncf %80 : vector<16x16xf32> to vector<16x16xbf16>
    %82 = vector.extract_strided_slice %52 {offsets = [0, 640], sizes = [16, 16], strides = [1, 1]} : vector<16x768xf32> to vector<16x16xf32>
    %83 = arith.truncf %82 : vector<16x16xf32> to vector<16x16xbf16>
    "tpu.trace_start"() <{level = 10 : i32, message = "qd,kd->qk"}> : () -> ()
    %cst_37 = arith.constant dense<0.000000e+00> : vector<16x16xf32>
    %84 = tpu.matmul %79, %81, %cst_37 {dimension_numbers = #tpu.dot_dimension_numbers<[1], [1], [0], [0], [0, 0, 1, 0], [], []>} : vector<16x16xbf16>, vector<16x16xbf16>, vector<16x16xf32> -> vector<16x16xf32>
    "tpu.trace_stop"() : () -> ()
    %85 = arith.addf %84, %44 : vector<16x16xf32>
    %cst_38 = arith.constant dense<0xFF800000> : vector<16xf32>
    %86 = vector.multi_reduction <maximumf>, %85, %cst_38 [1] : vector<16x16xf32> to vector<16xf32>
    %87 = vector.shape_cast %86 : vector<16xf32> to vector<16x1xf32>
    %88 = vector.broadcast %87 : vector<16x1xf32> to vector<16x16xf32>
    %89 = arith.subf %85, %88 : vector<16x16xf32>
    %90 = math.exp %89 : vector<16x16xf32>
    %cst_39 = arith.constant dense<0.000000e+00> : vector<16xf32>
    %91 = vector.multi_reduction <add>, %90, %cst_39 [1] : vector<16x16xf32> to vector<16xf32>
    %92 = vector.shape_cast %91 : vector<16xf32> to vector<16x1xf32>
    %93 = tpu.reciprocal %92 {approx = true} : vector<16x1xf32> -> vector<16x1xf32>
    %94 = vector.broadcast %93 : vector<16x1xf32> to vector<16x16xf32>
    %95 = arith.mulf %90, %94 : vector<16x16xf32>
    %96 = arith.truncf %95 : vector<16x16xf32> to vector<16x16xbf16>
    %cst_40 = arith.constant dense<0.000000e+00> : vector<16x16xf32>
    %97 = tpu.matmul %96, %83, %cst_40 {dimension_numbers = #tpu.dot_dimension_numbers<[1], [0], [0], [1], [0, 0, 1, 1], [], []>} : vector<16x16xbf16>, vector<16x16xbf16>, vector<16x16xf32> -> vector<16x16xf32>
    %98 = vector.extract_strided_slice %54 {offsets = [16, 0], sizes = [16, 32], strides = [1, 1]} : vector<32x32xbf16> to vector<16x32xbf16>
    %99 = arith.truncf %97 : vector<16x16xf32> to vector<16x16xbf16>
    %cst_41 = arith.constant dense<0.000000e+00> : vector<16x32xf32>
    %100 = tpu.matmul %99, %98, %cst_41 {dimension_numbers = #tpu.dot_dimension_numbers<[1], [0], [0], [1], [0, 0, 1, 1], [], []>} : vector<16x16xbf16>, vector<16x32xbf16>, vector<16x32xf32> -> vector<16x32xf32>
    %101 = arith.addf %77, %100 : vector<16x32xf32>
    %c0_42 = arith.constant 0 : index
    %c0_43 = arith.constant 0 : index
    %c0_44 = arith.constant 0 : index
    %102 = vector.load %arg10[%c0_42, %c0_43, %c0_44] : memref<2x1x32xf32, #tpu.memory_space<vmem>>, vector<1x1x32xf32>
    %103 = vector.shape_cast %102 : vector<1x1x32xf32> to vector<1x32xf32>
    %104 = vector.broadcast %103 : vector<1x32xf32> to vector<16x32xf32>
    %105 = arith.addf %101, %104 : vector<16x32xf32>
    %106 = arith.addf %105, %35 : vector<16x32xf32>
    %c0_45 = arith.constant 0 : index
    %c0_46 = arith.constant 0 : index
    %c0_47 = arith.constant 0 : index
    %107 = vector.load %arg11[%c0_45, %c0_46, %c0_47] : memref<2x1x32xf32, #tpu.memory_space<vmem>>, vector<1x1x32xf32>
    %108 = vector.shape_cast %107 : vector<1x1x32xf32> to vector<1x32xf32>
    %c0_48 = arith.constant 0 : index
    %c0_49 = arith.constant 0 : index
    %c0_50 = arith.constant 0 : index
    %109 = vector.load %arg12[%c0_48, %c0_49, %c0_50] : memref<2x1x32xf32, #tpu.memory_space<vmem>>, vector<1x1x32xf32>
    %110 = vector.shape_cast %109 : vector<1x1x32xf32> to vector<1x32xf32>
    %cst_51 = arith.constant dense<0.000000e+00> : vector<16xf32>
    %111 = vector.multi_reduction <add>, %106, %cst_51 [1] : vector<16x32xf32> to vector<16xf32>
    %112 = vector.shape_cast %111 : vector<16xf32> to vector<16x1xf32>
    %cst_52 = arith.constant 3.200000e+01 : f32
    %113 = vector.broadcast %cst_52 : f32 to vector<16x1xf32>
    %114 = arith.divf %112, %113 : vector<16x1xf32>
    %115 = vector.broadcast %114 : vector<16x1xf32> to vector<16x32xf32>
    %116 = arith.subf %106, %115 : vector<16x32xf32>
    %117 = arith.mulf %116, %116 : vector<16x32xf32>
    %cst_53 = arith.constant dense<0.000000e+00> : vector<16xf32>
    %118 = vector.multi_reduction <add>, %117, %cst_53 [1] : vector<16x32xf32> to vector<16xf32>
    %119 = vector.shape_cast %118 : vector<16xf32> to vector<16x1xf32>
    %cst_54 = arith.constant 3.200000e+01 : f32
    %120 = vector.broadcast %cst_54 : f32 to vector<16x1xf32>
    %121 = arith.divf %119, %120 : vector<16x1xf32>
    %122 = vector.broadcast %114 : vector<16x1xf32> to vector<16x32xf32>
    %123 = arith.subf %106, %122 : vector<16x32xf32>
    %cst_55 = arith.constant 9.99999996E-13 : f32
    %124 = vector.broadcast %cst_55 : f32 to vector<16x1xf32>
    %125 = arith.addf %121, %124 : vector<16x1xf32>
    %126 = math.rsqrt %125 : vector<16x1xf32>
    %127 = vector.broadcast %126 : vector<16x1xf32> to vector<16x32xf32>
    %128 = arith.mulf %123, %127 : vector<16x32xf32>
    %129 = vector.broadcast %108 : vector<1x32xf32> to vector<16x32xf32>
    %130 = arith.mulf %128, %129 : vector<16x32xf32>
    %131 = vector.broadcast %110 : vector<1x32xf32> to vector<16x32xf32>
    %132 = arith.addf %130, %131 : vector<16x32xf32>
    %133 = arith.truncf %132 : vector<16x32xf32> to vector<16x32xbf16>
    %c0_56 = arith.constant 0 : index
    %c0_57 = arith.constant 0 : index
    %c0_58 = arith.constant 0 : index
    %134 = vector.load %arg13[%c0_56, %c0_57, %c0_58] : memref<2x32x64xbf16, #tpu.memory_space<vmem>>, vector<1x32x64xbf16>
    %135 = vector.shape_cast %134 : vector<1x32x64xbf16> to vector<32x64xbf16>
    %cst_59 = arith.constant dense<0.000000e+00> : vector<16x64xf32>
    %136 = tpu.matmul %133, %135, %cst_59 {dimension_numbers = #tpu.dot_dimension_numbers<[1], [0], [0], [1], [0, 0, 1, 1], [], []>} : vector<16x32xbf16>, vector<32x64xbf16>, vector<16x64xf32> -> vector<16x64xf32>
    %c0_60 = arith.constant 0 : index
    %c0_61 = arith.constant 0 : index
    %c0_62 = arith.constant 0 : index
    %137 = vector.load %arg14[%c0_60, %c0_61, %c0_62] : memref<2x1x64xf32, #tpu.memory_space<vmem>>, vector<1x1x64xf32>
    %138 = vector.shape_cast %137 : vector<1x1x64xf32> to vector<1x64xf32>
    %139 = vector.broadcast %138 : vector<1x64xf32> to vector<16x64xf32>
    %140 = arith.addf %136, %139 : vector<16x64xf32>
    %141 = arith.mulf %140, %140 : vector<16x64xf32>
    %142 = arith.mulf %140, %141 : vector<16x64xf32>
    %cst_63 = arith.constant 4.471500e-02 : f32
    %143 = vector.broadcast %cst_63 : f32 to vector<16x64xf32>
    %144 = arith.mulf %143, %142 : vector<16x64xf32>
    %145 = arith.addf %140, %144 : vector<16x64xf32>
    %cst_64 = arith.constant 0.797884583 : f32
    %146 = vector.broadcast %cst_64 : f32 to vector<16x64xf32>
    %147 = arith.mulf %146, %145 : vector<16x64xf32>
    %148 = math.tanh %147 : vector<16x64xf32>
    %cst_65 = arith.constant 1.000000e+00 : f32
    %149 = vector.broadcast %cst_65 : f32 to vector<16x64xf32>
    %150 = arith.addf %149, %148 : vector<16x64xf32>
    %cst_66 = arith.constant 5.000000e-01 : f32
    %151 = vector.broadcast %cst_66 : f32 to vector<16x64xf32>
    %152 = arith.mulf %151, %150 : vector<16x64xf32>
    %153 = arith.mulf %140, %152 : vector<16x64xf32>
    %154 = arith.truncf %153 : vector<16x64xf32> to vector<16x64xbf16>
    %c0_67 = arith.constant 0 : index
    %c0_68 = arith.constant 0 : index
    %c0_69 = arith.constant 0 : index
    %155 = vector.load %arg15[%c0_67, %c0_68, %c0_69] : memref<2x64x32xbf16, #tpu.memory_space<vmem>>, vector<1x64x32xbf16>
    %156 = vector.shape_cast %155 : vector<1x64x32xbf16> to vector<64x32xbf16>
    %cst_70 = arith.constant dense<0.000000e+00> : vector<16x32xf32>
    %157 = tpu.matmul %154, %156, %cst_70 {dimension_numbers = #tpu.dot_dimension_numbers<[1], [0], [0], [1], [0, 0, 1, 1], [], []>} : vector<16x64xbf16>, vector<64x32xbf16>, vector<16x32xf32> -> vector<16x32xf32>
    %c0_71 = arith.constant 0 : index
    %c0_72 = arith.constant 0 : index
    %c0_73 = arith.constant 0 : index
    %158 = vector.load %arg16[%c0_71, %c0_72, %c0_73] : memref<2x1x32xf32, #tpu.memory_space<vmem>>, vector<1x1x32xf32>
    %159 = vector.shape_cast %158 : vector<1x1x32xf32> to vector<1x32xf32>
    %160 = vector.broadcast %159 : vector<1x32xf32> to vector<16x32xf32>
    %161 = arith.addf %157, %160 : vector<16x32xf32>
    %162 = arith.addf %161, %132 : vector<16x32xf32>
    %c0_74 = arith.constant 0 : index
    %c0_75 = arith.constant 0 : index
    %c0_76 = arith.constant 0 : index
    %163 = vector.load %arg17[%c0_74, %c0_75, %c0_76] : memref<2x1x32xf32, #tpu.memory_space<vmem>>, vector<1x1x32xf32>
    %164 = vector.shape_cast %163 : vector<1x1x32xf32> to vector<1x32xf32>
    %c0_77 = arith.constant 0 : index
    %c0_78 = arith.constant 0 : index
    %c0_79 = arith.constant 0 : index
    %165 = vector.load %arg18[%c0_77, %c0_78, %c0_79] : memref<2x1x32xf32, #tpu.memory_space<vmem>>, vector<1x1x32xf32>
    %166 = vector.shape_cast %165 : vector<1x1x32xf32> to vector<1x32xf32>
    %cst_80 = arith.constant dense<0.000000e+00> : vector<16xf32>
    %167 = vector.multi_reduction <add>, %162, %cst_80 [1] : vector<16x32xf32> to vector<16xf32>
    %168 = vector.shape_cast %167 : vector<16xf32> to vector<16x1xf32>
    %cst_81 = arith.constant 3.200000e+01 : f32
    %169 = vector.broadcast %cst_81 : f32 to vector<16x1xf32>
    %170 = arith.divf %168, %169 : vector<16x1xf32>
    %171 = vector.broadcast %170 : vector<16x1xf32> to vector<16x32xf32>
    %172 = arith.subf %162, %171 : vector<16x32xf32>
    %173 = arith.mulf %172, %172 : vector<16x32xf32>
    %cst_82 = arith.constant dense<0.000000e+00> : vector<16xf32>
    %174 = vector.multi_reduction <add>, %173, %cst_82 [1] : vector<16x32xf32> to vector<16xf32>
    %175 = vector.shape_cast %174 : vector<16xf32> to vector<16x1xf32>
    %cst_83 = arith.constant 3.200000e+01 : f32
    %176 = vector.broadcast %cst_83 : f32 to vector<16x1xf32>
    %177 = arith.divf %175, %176 : vector<16x1xf32>
    %178 = vector.broadcast %170 : vector<16x1xf32> to vector<16x32xf32>
    %179 = arith.subf %162, %178 : vector<16x32xf32>
    %cst_84 = arith.constant 9.99999996E-13 : f32
    %180 = vector.broadcast %cst_84 : f32 to vector<16x1xf32>
    %181 = arith.addf %177, %180 : vector<16x1xf32>
    %182 = math.rsqrt %181 : vector<16x1xf32>
    %183 = vector.broadcast %182 : vector<16x1xf32> to vector<16x32xf32>
    %184 = arith.mulf %179, %183 : vector<16x32xf32>
    %185 = vector.broadcast %164 : vector<1x32xf32> to vector<16x32xf32>
    %186 = arith.mulf %184, %185 : vector<16x32xf32>
    %187 = vector.broadcast %166 : vector<1x32xf32> to vector<16x32xf32>
    %188 = arith.addf %186, %187 : vector<16x32xf32>
    %189 = arith.truncf %188 : vector<16x32xf32> to vector<16x32xbf16>
    %c1 = arith.constant 1 : index
    %c0_85 = arith.constant 0 : index
    %c0_86 = arith.constant 0 : index
    %190 = vector.load %arg7[%c1, %c0_85, %c0_86] : memref<2x32x768xbf16, #tpu.memory_space<vmem>>, vector<1x32x768xbf16>
    %191 = vector.shape_cast %190 : vector<1x32x768xbf16> to vector<32x768xbf16>
    %cst_87 = arith.constant dense<0.000000e+00> : vector<16x768xf32>
    %192 = tpu.matmul %189, %191, %cst_87 {dimension_numbers = #tpu.dot_dimension_numbers<[1], [0], [0], [1], [0, 0, 1, 1], [], []>} : vector<16x32xbf16>, vector<32x768xbf16>, vector<16x768xf32> -> vector<16x768xf32>
    %c1_88 = arith.constant 1 : index
    %c0_89 = arith.constant 0 : index
    %c0_90 = arith.constant 0 : index
    %193 = vector.load %arg8[%c1_88, %c0_89, %c0_90] : memref<2x1x768xf32, #tpu.memory_space<vmem>>, vector<1x1x768xf32>
    %194 = vector.shape_cast %193 : vector<1x1x768xf32> to vector<1x768xf32>
    %195 = vector.broadcast %194 : vector<1x768xf32> to vector<16x768xf32>
    %196 = arith.addf %192, %195 : vector<16x768xf32>
    %c1_91 = arith.constant 1 : index
    %c0_92 = arith.constant 0 : index
    %c0_93 = arith.constant 0 : index
    %197 = vector.load %arg9[%c1_91, %c0_92, %c0_93] : memref<2x32x32xbf16, #tpu.memory_space<vmem>>, vector<1x32x32xbf16>
    %198 = vector.shape_cast %197 : vector<1x32x32xbf16> to vector<32x32xbf16>
    %199 = vector.extract_strided_slice %196 {offsets = [0, 0], sizes = [16, 16], strides = [1, 1]} : vector<16x768xf32> to vector<16x16xf32>
    %200 = arith.truncf %199 : vector<16x16xf32> to vector<16x16xbf16>
    %201 = vector.extract_strided_slice %196 {offsets = [0, 256], sizes = [16, 16], strides = [1, 1]} : vector<16x768xf32> to vector<16x16xf32>
    %202 = arith.truncf %201 : vector<16x16xf32> to vector<16x16xbf16>
    %203 = vector.extract_strided_slice %196 {offsets = [0, 512], sizes = [16, 16], strides = [1, 1]} : vector<16x768xf32> to vector<16x16xf32>
    %204 = arith.truncf %203 : vector<16x16xf32> to vector<16x16xbf16>
    "tpu.trace_start"() <{level = 10 : i32, message = "qd,kd->qk"}> : () -> ()
    %cst_94 = arith.constant dense<0.000000e+00> : vector<16x16xf32>
    %205 = tpu.matmul %200, %202, %cst_94 {dimension_numbers = #tpu.dot_dimension_numbers<[1], [1], [0], [0], [0, 0, 1, 0], [], []>} : vector<16x16xbf16>, vector<16x16xbf16>, vector<16x16xf32> -> vector<16x16xf32>
    "tpu.trace_stop"() : () -> ()
    %206 = arith.addf %205, %44 : vector<16x16xf32>
    %cst_95 = arith.constant dense<0xFF800000> : vector<16xf32>
    %207 = vector.multi_reduction <maximumf>, %206, %cst_95 [1] : vector<16x16xf32> to vector<16xf32>
    %208 = vector.shape_cast %207 : vector<16xf32> to vector<16x1xf32>
    %209 = vector.broadcast %208 : vector<16x1xf32> to vector<16x16xf32>
    %210 = arith.subf %206, %209 : vector<16x16xf32>
    %211 = math.exp %210 : vector<16x16xf32>
    %cst_96 = arith.constant dense<0.000000e+00> : vector<16xf32>
    %212 = vector.multi_reduction <add>, %211, %cst_96 [1] : vector<16x16xf32> to vector<16xf32>
    %213 = vector.shape_cast %212 : vector<16xf32> to vector<16x1xf32>
    %214 = tpu.reciprocal %213 {approx = true} : vector<16x1xf32> -> vector<16x1xf32>
    %215 = vector.broadcast %214 : vector<16x1xf32> to vector<16x16xf32>
    %216 = arith.mulf %211, %215 : vector<16x16xf32>
    %217 = arith.truncf %216 : vector<16x16xf32> to vector<16x16xbf16>
    %cst_97 = arith.constant dense<0.000000e+00> : vector<16x16xf32>
    %218 = tpu.matmul %217, %204, %cst_97 {dimension_numbers = #tpu.dot_dimension_numbers<[1], [0], [0], [1], [0, 0, 1, 1], [], []>} : vector<16x16xbf16>, vector<16x16xbf16>, vector<16x16xf32> -> vector<16x16xf32>
    %219 = vector.extract_strided_slice %198 {offsets = [0, 0], sizes = [16, 32], strides = [1, 1]} : vector<32x32xbf16> to vector<16x32xbf16>
    %220 = arith.truncf %218 : vector<16x16xf32> to vector<16x16xbf16>
    %cst_98 = arith.constant dense<0.000000e+00> : vector<16x32xf32>
    %221 = tpu.matmul %220, %219, %cst_98 {dimension_numbers = #tpu.dot_dimension_numbers<[1], [0], [0], [1], [0, 0, 1, 1], [], []>} : vector<16x16xbf16>, vector<16x32xbf16>, vector<16x32xf32> -> vector<16x32xf32>
    %222 = vector.extract_strided_slice %196 {offsets = [0, 128], sizes = [16, 16], strides = [1, 1]} : vector<16x768xf32> to vector<16x16xf32>
    %223 = arith.truncf %222 : vector<16x16xf32> to vector<16x16xbf16>
    %224 = vector.extract_strided_slice %196 {offsets = [0, 384], sizes = [16, 16], strides = [1, 1]} : vector<16x768xf32> to vector<16x16xf32>
    %225 = arith.truncf %224 : vector<16x16xf32> to vector<16x16xbf16>
    %226 = vector.extract_strided_slice %196 {offsets = [0, 640], sizes = [16, 16], strides = [1, 1]} : vector<16x768xf32> to vector<16x16xf32>
    %227 = arith.truncf %226 : vector<16x16xf32> to vector<16x16xbf16>
    "tpu.trace_start"() <{level = 10 : i32, message = "qd,kd->qk"}> : () -> ()
    %cst_99 = arith.constant dense<0.000000e+00> : vector<16x16xf32>
    %228 = tpu.matmul %223, %225, %cst_99 {dimension_numbers = #tpu.dot_dimension_numbers<[1], [1], [0], [0], [0, 0, 1, 0], [], []>} : vector<16x16xbf16>, vector<16x16xbf16>, vector<16x16xf32> -> vector<16x16xf32>
    "tpu.trace_stop"() : () -> ()
    %229 = arith.addf %228, %44 : vector<16x16xf32>
    %cst_100 = arith.constant dense<0xFF800000> : vector<16xf32>
    %230 = vector.multi_reduction <maximumf>, %229, %cst_100 [1] : vector<16x16xf32> to vector<16xf32>
    %231 = vector.shape_cast %230 : vector<16xf32> to vector<16x1xf32>
    %232 = vector.broadcast %231 : vector<16x1xf32> to vector<16x16xf32>
    %233 = arith.subf %229, %232 : vector<16x16xf32>
    %234 = math.exp %233 : vector<16x16xf32>
    %cst_101 = arith.constant dense<0.000000e+00> : vector<16xf32>
    %235 = vector.multi_reduction <add>, %234, %cst_101 [1] : vector<16x16xf32> to vector<16xf32>
    %236 = vector.shape_cast %235 : vector<16xf32> to vector<16x1xf32>
    %237 = tpu.reciprocal %236 {approx = true} : vector<16x1xf32> -> vector<16x1xf32>
    %238 = vector.broadcast %237 : vector<16x1xf32> to vector<16x16xf32>
    %239 = arith.mulf %234, %238 : vector<16x16xf32>
    %240 = arith.truncf %239 : vector<16x16xf32> to vector<16x16xbf16>
    %cst_102 = arith.constant dense<0.000000e+00> : vector<16x16xf32>
    %241 = tpu.matmul %240, %227, %cst_102 {dimension_numbers = #tpu.dot_dimension_numbers<[1], [0], [0], [1], [0, 0, 1, 1], [], []>} : vector<16x16xbf16>, vector<16x16xbf16>, vector<16x16xf32> -> vector<16x16xf32>
    %242 = vector.extract_strided_slice %198 {offsets = [16, 0], sizes = [16, 32], strides = [1, 1]} : vector<32x32xbf16> to vector<16x32xbf16>
    %243 = arith.truncf %241 : vector<16x16xf32> to vector<16x16xbf16>
    %cst_103 = arith.constant dense<0.000000e+00> : vector<16x32xf32>
    %244 = tpu.matmul %243, %242, %cst_103 {dimension_numbers = #tpu.dot_dimension_numbers<[1], [0], [0], [1], [0, 0, 1, 1], [], []>} : vector<16x16xbf16>, vector<16x32xbf16>, vector<16x32xf32> -> vector<16x32xf32>
    %245 = arith.addf %221, %244 : vector<16x32xf32>
    %c1_104 = arith.constant 1 : index
    %c0_105 = arith.constant 0 : index
    %c0_106 = arith.constant 0 : index
    %246 = vector.load %arg10[%c1_104, %c0_105, %c0_106] : memref<2x1x32xf32, #tpu.memory_space<vmem>>, vector<1x1x32xf32>
    %247 = vector.shape_cast %246 : vector<1x1x32xf32> to vector<1x32xf32>
    %248 = vector.broadcast %247 : vector<1x32xf32> to vector<16x32xf32>
    %249 = arith.addf %245, %248 : vector<16x32xf32>
    %250 = arith.addf %249, %188 : vector<16x32xf32>
    %c1_107 = arith.constant 1 : index
    %c0_108 = arith.constant 0 : index
    %c0_109 = arith.constant 0 : index
    %251 = vector.load %arg11[%c1_107, %c0_108, %c0_109] : memref<2x1x32xf32, #tpu.memory_space<vmem>>, vector<1x1x32xf32>
    %252 = vector.shape_cast %251 : vector<1x1x32xf32> to vector<1x32xf32>
    %c1_110 = arith.constant 1 : index
    %c0_111 = arith.constant 0 : index
    %c0_112 = arith.constant 0 : index
    %253 = vector.load %arg12[%c1_110, %c0_111, %c0_112] : memref<2x1x32xf32, #tpu.memory_space<vmem>>, vector<1x1x32xf32>
    %254 = vector.shape_cast %253 : vector<1x1x32xf32> to vector<1x32xf32>
    %cst_113 = arith.constant dense<0.000000e+00> : vector<16xf32>
    %255 = vector.multi_reduction <add>, %250, %cst_113 [1] : vector<16x32xf32> to vector<16xf32>
    %256 = vector.shape_cast %255 : vector<16xf32> to vector<16x1xf32>
    %cst_114 = arith.constant 3.200000e+01 : f32
    %257 = vector.broadcast %cst_114 : f32 to vector<16x1xf32>
    %258 = arith.divf %256, %257 : vector<16x1xf32>
    %259 = vector.broadcast %258 : vector<16x1xf32> to vector<16x32xf32>
    %260 = arith.subf %250, %259 : vector<16x32xf32>
    %261 = arith.mulf %260, %260 : vector<16x32xf32>
    %cst_115 = arith.constant dense<0.000000e+00> : vector<16xf32>
    %262 = vector.multi_reduction <add>, %261, %cst_115 [1] : vector<16x32xf32> to vector<16xf32>
    %263 = vector.shape_cast %262 : vector<16xf32> to vector<16x1xf32>
    %cst_116 = arith.constant 3.200000e+01 : f32
    %264 = vector.broadcast %cst_116 : f32 to vector<16x1xf32>
    %265 = arith.divf %263, %264 : vector<16x1xf32>
    %266 = vector.broadcast %258 : vector<16x1xf32> to vector<16x32xf32>
    %267 = arith.subf %250, %266 : vector<16x32xf32>
    %cst_117 = arith.constant 9.99999996E-13 : f32
    %268 = vector.broadcast %cst_117 : f32 to vector<16x1xf32>
    %269 = arith.addf %265, %268 : vector<16x1xf32>
    %270 = math.rsqrt %269 : vector<16x1xf32>
    %271 = vector.broadcast %270 : vector<16x1xf32> to vector<16x32xf32>
    %272 = arith.mulf %267, %271 : vector<16x32xf32>
    %273 = vector.broadcast %252 : vector<1x32xf32> to vector<16x32xf32>
    %274 = arith.mulf %272, %273 : vector<16x32xf32>
    %275 = vector.broadcast %254 : vector<1x32xf32> to vector<16x32xf32>
    %276 = arith.addf %274, %275 : vector<16x32xf32>
    %277 = arith.truncf %276 : vector<16x32xf32> to vector<16x32xbf16>
    %c1_118 = arith.constant 1 : index
    %c0_119 = arith.constant 0 : index
    %c0_120 = arith.constant 0 : index
    %278 = vector.load %arg13[%c1_118, %c0_119, %c0_120] : memref<2x32x64xbf16, #tpu.memory_space<vmem>>, vector<1x32x64xbf16>
    %279 = vector.shape_cast %278 : vector<1x32x64xbf16> to vector<32x64xbf16>
    %cst_121 = arith.constant dense<0.000000e+00> : vector<16x64xf32>
    %280 = tpu.matmul %277, %279, %cst_121 {dimension_numbers = #tpu.dot_dimension_numbers<[1], [0], [0], [1], [0, 0, 1, 1], [], []>} : vector<16x32xbf16>, vector<32x64xbf16>, vector<16x64xf32> -> vector<16x64xf32>
    %c1_122 = arith.constant 1 : index
    %c0_123 = arith.constant 0 : index
    %c0_124 = arith.constant 0 : index
    %281 = vector.load %arg14[%c1_122, %c0_123, %c0_124] : memref<2x1x64xf32, #tpu.memory_space<vmem>>, vector<1x1x64xf32>
    %282 = vector.shape_cast %281 : vector<1x1x64xf32> to vector<1x64xf32>
    %283 = vector.broadcast %282 : vector<1x64xf32> to vector<16x64xf32>
    %284 = arith.addf %280, %283 : vector<16x64xf32>
    %285 = arith.mulf %284, %284 : vector<16x64xf32>
    %286 = arith.mulf %284, %285 : vector<16x64xf32>
    %cst_125 = arith.constant 4.471500e-02 : f32
    %287 = vector.broadcast %cst_125 : f32 to vector<16x64xf32>
    %288 = arith.mulf %287, %286 : vector<16x64xf32>
    %289 = arith.addf %284, %288 : vector<16x64xf32>
    %cst_126 = arith.constant 0.797884583 : f32
    %290 = vector.broadcast %cst_126 : f32 to vector<16x64xf32>
    %291 = arith.mulf %290, %289 : vector<16x64xf32>
    %292 = math.tanh %291 : vector<16x64xf32>
    %cst_127 = arith.constant 1.000000e+00 : f32
    %293 = vector.broadcast %cst_127 : f32 to vector<16x64xf32>
    %294 = arith.addf %293, %292 : vector<16x64xf32>
    %cst_128 = arith.constant 5.000000e-01 : f32
    %295 = vector.broadcast %cst_128 : f32 to vector<16x64xf32>
    %296 = arith.mulf %295, %294 : vector<16x64xf32>
    %297 = arith.mulf %284, %296 : vector<16x64xf32>
    %298 = arith.truncf %297 : vector<16x64xf32> to vector<16x64xbf16>
    %c1_129 = arith.constant 1 : index
    %c0_130 = arith.constant 0 : index
    %c0_131 = arith.constant 0 : index
    %299 = vector.load %arg15[%c1_129, %c0_130, %c0_131] : memref<2x64x32xbf16, #tpu.memory_space<vmem>>, vector<1x64x32xbf16>
    %300 = vector.shape_cast %299 : vector<1x64x32xbf16> to vector<64x32xbf16>
    %cst_132 = arith.constant dense<0.000000e+00> : vector<16x32xf32>
    %301 = tpu.matmul %298, %300, %cst_132 {dimension_numbers = #tpu.dot_dimension_numbers<[1], [0], [0], [1], [0, 0, 1, 1], [], []>} : vector<16x64xbf16>, vector<64x32xbf16>, vector<16x32xf32> -> vector<16x32xf32>
    %c1_133 = arith.constant 1 : index
    %c0_134 = arith.constant 0 : index
    %c0_135 = arith.constant 0 : index
    %302 = vector.load %arg16[%c1_133, %c0_134, %c0_135] : memref<2x1x32xf32, #tpu.memory_space<vmem>>, vector<1x1x32xf32>
    %303 = vector.shape_cast %302 : vector<1x1x32xf32> to vector<1x32xf32>
    %304 = vector.broadcast %303 : vector<1x32xf32> to vector<16x32xf32>
    %305 = arith.addf %301, %304 : vector<16x32xf32>
    %306 = arith.addf %305, %276 : vector<16x32xf32>
    %c1_136 = arith.constant 1 : index
    %c0_137 = arith.constant 0 : index
    %c0_138 = arith.constant 0 : index
    %307 = vector.load %arg17[%c1_136, %c0_137, %c0_138] : memref<2x1x32xf32, #tpu.memory_space<vmem>>, vector<1x1x32xf32>
    %308 = vector.shape_cast %307 : vector<1x1x32xf32> to vector<1x32xf32>
    %c1_139 = arith.constant 1 : index
    %c0_140 = arith.constant 0 : index
    %c0_141 = arith.constant 0 : index
    %309 = vector.load %arg18[%c1_139, %c0_140, %c0_141] : memref<2x1x32xf32, #tpu.memory_space<vmem>>, vector<1x1x32xf32>
    %310 = vector.shape_cast %309 : vector<1x1x32xf32> to vector<1x32xf32>
    %cst_142 = arith.constant dense<0.000000e+00> : vector<16xf32>
    %311 = vector.multi_reduction <add>, %306, %cst_142 [1] : vector<16x32xf32> to vector<16xf32>
    %312 = vector.shape_cast %311 : vector<16xf32> to vector<16x1xf32>
    %cst_143 = arith.constant 3.200000e+01 : f32
    %313 = vector.broadcast %cst_143 : f32 to vector<16x1xf32>
    %314 = arith.divf %312, %313 : vector<16x1xf32>
    %315 = vector.broadcast %314 : vector<16x1xf32> to vector<16x32xf32>
    %316 = arith.subf %306, %315 : vector<16x32xf32>
    %317 = arith.mulf %316, %316 : vector<16x32xf32>
    %cst_144 = arith.constant dense<0.000000e+00> : vector<16xf32>
    %318 = vector.multi_reduction <add>, %317, %cst_144 [1] : vector<16x32xf32> to vector<16xf32>
    %319 = vector.shape_cast %318 : vector<16xf32> to vector<16x1xf32>
    %cst_145 = arith.constant 3.200000e+01 : f32
    %320 = vector.broadcast %cst_145 : f32 to vector<16x1xf32>
    %321 = arith.divf %319, %320 : vector<16x1xf32>
    %322 = vector.broadcast %314 : vector<16x1xf32> to vector<16x32xf32>
    %323 = arith.subf %306, %322 : vector<16x32xf32>
    %cst_146 = arith.constant 9.99999996E-13 : f32
    %324 = vector.broadcast %cst_146 : f32 to vector<16x1xf32>
    %325 = arith.addf %321, %324 : vector<16x1xf32>
    %326 = math.rsqrt %325 : vector<16x1xf32>
    %327 = vector.broadcast %326 : vector<16x1xf32> to vector<16x32xf32>
    %328 = arith.mulf %323, %327 : vector<16x32xf32>
    %329 = vector.broadcast %308 : vector<1x32xf32> to vector<16x32xf32>
    %330 = arith.mulf %328, %329 : vector<16x32xf32>
    %331 = vector.broadcast %310 : vector<1x32xf32> to vector<16x32xf32>
    %332 = arith.addf %330, %331 : vector<16x32xf32>
    %333 = arith.truncf %332 : vector<16x32xf32> to vector<16x32xbf16>
    %c0_147 = arith.constant 0 : index
    %c0_148 = arith.constant 0 : index
    %334 = vector.load %arg19[%c0_147, %c0_148] : memref<32x32xbf16, #tpu.memory_space<vmem>>, vector<32x32xbf16>
    %cst_149 = arith.constant dense<0.000000e+00> : vector<16x32xf32>
    %335 = tpu.matmul %333, %334, %cst_149 {dimension_numbers = #tpu.dot_dimension_numbers<[1], [0], [0], [1], [0, 0, 1, 1], [], []>} : vector<16x32xbf16>, vector<32x32xbf16>, vector<16x32xf32> -> vector<16x32xf32>
    %c0_150 = arith.constant 0 : index
    %c0_151 = arith.constant 0 : index
    %336 = vector.load %arg20[%c0_150, %c0_151] : memref<1x32xf32, #tpu.memory_space<vmem>>, vector<1x32xf32>
    %337 = vector.broadcast %336 : vector<1x32xf32> to vector<16x32xf32>
    %338 = arith.addf %335, %337 : vector<16x32xf32>
    %339 = arith.mulf %338, %338 : vector<16x32xf32>
    %340 = arith.mulf %338, %339 : vector<16x32xf32>
    %cst_152 = arith.constant 4.471500e-02 : f32
    %341 = vector.broadcast %cst_152 : f32 to vector<16x32xf32>
    %342 = arith.mulf %341, %340 : vector<16x32xf32>
    %343 = arith.addf %338, %342 : vector<16x32xf32>
    %cst_153 = arith.constant 0.797884583 : f32
    %344 = vector.broadcast %cst_153 : f32 to vector<16x32xf32>
    %345 = arith.mulf %344, %343 : vector<16x32xf32>
    %346 = math.tanh %345 : vector<16x32xf32>
    %cst_154 = arith.constant 1.000000e+00 : f32
    %347 = vector.broadcast %cst_154 : f32 to vector<16x32xf32>
    %348 = arith.addf %347, %346 : vector<16x32xf32>
    %cst_155 = arith.constant 5.000000e-01 : f32
    %349 = vector.broadcast %cst_155 : f32 to vector<16x32xf32>
    %350 = arith.mulf %349, %348 : vector<16x32xf32>
    %351 = arith.mulf %338, %350 : vector<16x32xf32>
    %c0_156 = arith.constant 0 : index
    %c0_157 = arith.constant 0 : index
    %352 = vector.load %arg21[%c0_156, %c0_157] : memref<1x32xf32, #tpu.memory_space<vmem>>, vector<1x32xf32>
    %c0_158 = arith.constant 0 : index
    %c0_159 = arith.constant 0 : index
    %353 = vector.load %arg22[%c0_158, %c0_159] : memref<1x32xf32, #tpu.memory_space<vmem>>, vector<1x32xf32>
    %cst_160 = arith.constant dense<0.000000e+00> : vector<16xf32>
    %354 = vector.multi_reduction <add>, %351, %cst_160 [1] : vector<16x32xf32> to vector<16xf32>
    %355 = vector.shape_cast %354 : vector<16xf32> to vector<16x1xf32>
    %cst_161 = arith.constant 3.200000e+01 : f32
    %356 = vector.broadcast %cst_161 : f32 to vector<16x1xf32>
    %357 = arith.divf %355, %356 : vector<16x1xf32>
    %358 = vector.broadcast %357 : vector<16x1xf32> to vector<16x32xf32>
    %359 = arith.subf %351, %358 : vector<16x32xf32>
    %360 = arith.mulf %359, %359 : vector<16x32xf32>
    %cst_162 = arith.constant dense<0.000000e+00> : vector<16xf32>
    %361 = vector.multi_reduction <add>, %360, %cst_162 [1] : vector<16x32xf32> to vector<16xf32>
    %362 = vector.shape_cast %361 : vector<16xf32> to vector<16x1xf32>
    %cst_163 = arith.constant 3.200000e+01 : f32
    %363 = vector.broadcast %cst_163 : f32 to vector<16x1xf32>
    %364 = arith.divf %362, %363 : vector<16x1xf32>
    %365 = vector.broadcast %357 : vector<16x1xf32> to vector<16x32xf32>
    %366 = arith.subf %351, %365 : vector<16x32xf32>
    %cst_164 = arith.constant 9.99999996E-13 : f32
    %367 = vector.broadcast %cst_164 : f32 to vector<16x1xf32>
    %368 = arith.addf %364, %367 : vector<16x1xf32>
    %369 = math.rsqrt %368 : vector<16x1xf32>
    %370 = vector.broadcast %369 : vector<16x1xf32> to vector<16x32xf32>
    %371 = arith.mulf %366, %370 : vector<16x32xf32>
    %372 = vector.broadcast %352 : vector<1x32xf32> to vector<16x32xf32>
    %373 = arith.mulf %371, %372 : vector<16x32xf32>
    %374 = vector.broadcast %353 : vector<1x32xf32> to vector<16x32xf32>
    %375 = arith.addf %373, %374 : vector<16x32xf32>
    %376 = arith.truncf %375 : vector<16x32xf32> to vector<16x32xbf16>
    %c0_165 = arith.constant 0 : index
    %c0_166 = arith.constant 0 : index
    %377 = vector.load %arg23[%c0_165, %c0_166] : memref<32x128xbf16, #tpu.memory_space<vmem>>, vector<32x128xbf16>
    %cst_167 = arith.constant dense<0.000000e+00> : vector<16x128xf32>
    %378 = tpu.matmul %376, %377, %cst_167 {dimension_numbers = #tpu.dot_dimension_numbers<[1], [0], [0], [1], [0, 0, 1, 1], [], []>} : vector<16x32xbf16>, vector<32x128xbf16>, vector<16x128xf32> -> vector<16x128xf32>
    %379 = arith.truncf %332 : vector<16x32xf32> to vector<16x32xbf16>
    %c0_168 = arith.constant 0 : index
    %c0_169 = arith.constant 0 : index
    %380 = vector.load %arg24[%c0_168, %c0_169] : memref<32x128xbf16, #tpu.memory_space<vmem>>, vector<32x128xbf16>
    %cst_170 = arith.constant dense<0.000000e+00> : vector<16x128xf32>
    %381 = tpu.matmul %379, %380, %cst_170 {dimension_numbers = #tpu.dot_dimension_numbers<[1], [0], [0], [1], [0, 0, 1, 1], [], []>} : vector<16x32xbf16>, vector<32x128xbf16>, vector<16x128xf32> -> vector<16x128xf32>
    %382 = arith.addf %378, %381 : vector<16x128xf32>
    %c0_171 = arith.constant 0 : index
    %c0_172 = arith.constant 0 : index
    %383 = vector.load %arg25[%c0_171, %c0_172] : memref<1x128xf32, #tpu.memory_space<vmem>>, vector<1x128xf32>
    %384 = vector.broadcast %383 : vector<1x128xf32> to vector<16x128xf32>
    %385 = arith.addf %382, %384 : vector<16x128xf32>
    %c0_173 = arith.constant 0 : index
    %c0_174 = arith.constant 0 : index
    %386 = vector.load %arg26[%c0_173, %c0_174] : memref<16x128xf32, #tpu.memory_space<vmem>>, vector<16x128xf32>
    tpu.vector_store %arg26[%c0_173, %c0_174], %385 {strides = array<i32>} : memref<16x128xf32, #tpu.memory_space<vmem>>, vector<16x128xf32>,
    return
  }
}

</mosaic_0001>

<llo_original>
// kernel: csc_forward.1
$region0: #{csc_forward.1}
  #allocation0 [shape = 'u32[]', space=smem, size = 0x4, offset = 0x4, fixed_abs, tag = 'smem constant byte address 0x4 - core index']
  #allocation1 [shape = 'u32[72,128]{1,0:T(1,128)}', space=vmem, size = 0x9000, scoped, tag = 'internal scratch']
  %s0 = inlined_call_operand.vmem [shape: s32[16,1], index: 0, kind: input, shape index: {}]
  %s1 = inlined_call_operand.vmem [shape: s32[1,16], index: 1, kind: input, shape index: {}]
  %s2 = inlined_call_operand.vmem [shape: f32[16,16], index: 2, kind: input, shape index: {}]
  %s3 = inlined_call_operand.vmem [shape: bf16[64,32], index: 3, kind: input, shape index: {}]
  %s4 = inlined_call_operand.vmem [shape: f32[16,32], index: 4, kind: input, shape index: {}]
  %s5 = inlined_call_operand.hbm [shape: f32[1,32], index: 5, kind: input, shape index: {}]
  %s6 = inlined_call_operand.hbm [shape: f32[1,32], index: 6, kind: input, shape index: {}]
  %s7 = inlined_call_operand.hbm [shape: bf16[2,32,768], index: 7, kind: input, shape index: {}]
  %s8 = inlined_call_operand.vmem [shape: f32[2,1,768], index: 8, kind: input, shape index: {}]
  %s9 = inlined_call_operand.vmem [shape: bf16[2,32,32], index: 9, kind: input, shape index: {}]
  %s10 = inlined_call_operand.hbm [shape: f32[2,1,32], index: 10, kind: input, shape index: {}]
  %s11 = inlined_call_operand.hbm [shape: f32[2,1,32], index: 11, kind: input, shape index: {}]
  %s12 = inlined_call_operand.hbm [shape: f32[2,1,32], index: 12, kind: input, shape index: {}]
  %s13 = inlined_call_operand.vmem [shape: bf16[2,32,64], index: 13, kind: input, shape index: {}]
  %s14 = inlined_call_operand.hbm [shape: f32[2,1,64], index: 14, kind: input, shape index: {}]
  %s15 = inlined_call_operand.vmem [shape: bf16[2,64,32], index: 15, kind: input, shape index: {}]
  %s16 = inlined_call_operand.hbm [shape: f32[2,1,32], index: 16, kind: input, shape index: {}]
  %s17 = inlined_call_operand.hbm [shape: f32[2,1,32], index: 17, kind: input, shape index: {}]
  %s18 = inlined_call_operand.hbm [shape: f32[2,1,32], index: 18, kind: input, shape index: {}]
  %s19 = inlined_call_operand.vmem [shape: bf16[32,32], index: 19, kind: input, shape index: {}]
  %s20 = inlined_call_operand.vmem [shape: f32[1,32], index: 20, kind: input, shape index: {}]
  %s21 = inlined_call_operand.vmem [shape: f32[1,32], index: 21, kind: input, shape index: {}]
  %s22 = inlined_call_operand.hbm [shape: f32[1,32], index: 22, kind: input, shape index: {}]
  %s23 = inlined_call_operand.hbm [shape: bf16[32,128], index: 23, kind: input, shape index: {}]
  %s24 = inlined_call_operand.hbm [shape: bf16[32,128], index: 24, kind: input, shape index: {}]
  %s25 = inlined_call_operand.hbm [shape: f32[1,128], index: 25, kind: input, shape index: {}]
  %s26 = inlined_call_operand.vmem [shape: f32[16,128], index: 26, kind: output, shape index: {}]
  %s27 = sld [smem:[#allocation0]]
  $region170: #{csc_forward.1} parent=0
    _
  %s29 = ssub.s32 1, %s27
  %s30 = scalar_select 0, %s29, %s27
  $region1: #{csc_forward.1} parent=0
    #allocation2 [shape = 'u8[512]{0}', space=vmem, size = 0x400, scoped, tag = 'input window, operand 5, single buffered']
    #allocation3 [shape = 's32[1]{0}', space=sflag, size = 0x4, scoped, tag = 'scoped memory for csc_forward.1']
    #allocation4 [shape = 'u8[512]{0}', space=vmem, size = 0x400, scoped, tag = 'input window, operand 6, single buffered']
    #allocation5 [shape = 's32[1]{0}', space=sflag, size = 0x4, scoped, tag = 'scoped memory for csc_forward.1']
    #allocation6 [shape = 'u8[98304]{0}', space=vmem, size = 0x18000, scoped, tag = 'input window, operand 7, single buffered']
    #allocation7 [shape = 'u8[1024]{0}', space=vmem, size = 0x400, scoped, tag = 'input window, operand 10, single buffered']
    #allocation8 [shape = 's32[1]{0}', space=sflag, size = 0x4, scoped, tag = 'scoped memory for csc_forward.1']
    #allocation9 [shape = 'u8[1024]{0}', space=vmem, size = 0x400, scoped, tag = 'input window, operand 11, single buffered']
    #allocation10 [shape = 'u8[1024]{0}', space=vmem, size = 0x400, scoped, tag = 'input window, operand 12, single buffered']
    #allocation11 [shape = 's32[1]{0}', space=sflag, size = 0x4, scoped, tag = 'scoped memory for csc_forward.1']
    #allocation12 [shape = 'u8[1024]{0}', space=vmem, size = 0x400, scoped, tag = 'input window, operand 14, single buffered']
    #allocation13 [shape = 'u8[1024]{0}', space=vmem, size = 0x400, scoped, tag = 'input window, operand 16, single buffered']
    #allocation14 [shape = 's32[1]{0}', space=sflag, size = 0x4, scoped, tag = 'scoped memory for csc_forward.1']
    #allocation15 [shape = 'u8[1024]{0}', space=vmem, size = 0x400, scoped, tag = 'input window, operand 17, single buffered']
    #allocation16 [shape = 'u8[1024]{0}', space=vmem, size = 0x400, scoped, tag = 'input window, operand 18, single buffered']
    #allocation17 [shape = 's32[1]{0}', space=sflag, size = 0x4, scoped, tag = 'scoped memory for csc_forward.1']
    #allocation18 [shape = 'u8[512]{0}', space=vmem, size = 0x400, scoped, tag = 'input window, operand 22, single buffered']
    #allocation19 [shape = 'u8[8192]{0}', space=vmem, size = 0x2000, scoped, tag = 'input window, operand 23, single buffered']
    #allocation20 [shape = 's32[1]{0}', space=sflag, size = 0x4, scoped, tag = 'scoped memory for csc_forward.1']
    #allocation21 [shape = 'u8[8192]{0}', space=vmem, size = 0x2000, scoped, tag = 'input window, operand 24, single buffered']
    #allocation22 [shape = 'u8[512]{0}', space=vmem, size = 0x400, scoped, tag = 'input window, operand 25, single buffered']
    #allocation23 [shape = 's32[1]{0}', space=sflag, size = 0x4, scoped, tag = 'scoped memory for csc_forward.1']
    %31 = vsyncpa [#allocation3], 0
    %32 = vsyncpa [#allocation5], 0
    %33 = vsyncpa [#allocation8], 0
    %34 = vsyncpa [#allocation11], 0
    %35 = vsyncpa [#allocation14], 0
    %36 = vsyncpa [#allocation17], 0
    %37 = vsyncpa [#allocation20], 0
    %38 = vsyncpa [#allocation23], 0
    // Predicated region
    $region2: #{csc_forward.1} parent=1 // pred_check
      _
    $region3: #{csc_forward.1} parent=1 // pred_check_branch
      %40 = sbr.rel (0) target = $region5
    $region4: #{csc_forward.1} parent=1 // pred_region
      _
    $region5: #{csc_forward.1} parent=1 // pred_fallthru
      _
    // Predicated region
    $region6: #{csc_forward.1} parent=1 // pred_check
      _
    $region7: #{csc_forward.1} parent=1 // pred_check_branch
      %42 = sbr.rel (0) target = $region9
    $region8: #{csc_forward.1} parent=1 // pred_region
      _
    $region9: #{csc_forward.1} parent=1 // pred_fallthru
      _
    // Predicated region
    $region10: #{csc_forward.1} parent=1 // pred_check
      _
    $region11: #{csc_forward.1} parent=1 // pred_check_branch
      %44 = sbr.rel (0) target = $region13
    $region12: #{csc_forward.1} parent=1 // pred_region
      _
    $region13: #{csc_forward.1} parent=1 // pred_fallthru
      _
    // Predicated region
    $region14: #{csc_forward.1} parent=1 // pred_check
      _
    $region15: #{csc_forward.1} parent=1 // pred_check_branch
      %46 = sbr.rel (0) target = $region17
    $region16: #{csc_forward.1} parent=1 // pred_region
      _
    $region17: #{csc_forward.1} parent=1 // pred_fallthru
      _
    // Predicated region
    $region18: #{csc_forward.1} parent=1 // pred_check
      _
    $region19: #{csc_forward.1} parent=1 // pred_check_branch
      %48 = sbr.rel (0) target = $region21
    $region20: #{csc_forward.1} parent=1 // pred_region
      _
    $region21: #{csc_forward.1} parent=1 // pred_fallthru
      _
    // Predicated region
    $region22: #{csc_forward.1} parent=1 // pred_check
      _
    $region23: #{csc_forward.1} parent=1 // pred_check_branch
      %50 = sbr.rel (0) target = $region25
    $region24: #{csc_forward.1} parent=1 // pred_region
      %52 = vsyncadd [#allocation3], 0
      %s54 = sshll.u32 %s5, 4
      %s55 = int_to_ptr.hbm [resolvable:$true] %s54
      %s56 = sshll.u32 [#allocation2], 4
      %s57 = int_to_ptr.vmem [resolvable:$true] %s56
      %59 = dma.hbm_to_vmem [thread:$0]  %s55, 16, %s57, [#allocation3]
    $region25: #{csc_forward.1} parent=1 // pred_fallthru
      _
    // Predicated region
    $region26: #{csc_forward.1} parent=1 // pred_check
      _
    $region27: #{csc_forward.1} parent=1 // pred_check_branch
      %61 = sbr.rel (0) target = $region29
    $region28: #{csc_forward.1} parent=1 // pred_region
      %63 = vsyncadd [#allocation5], 0
      %s65 = sshll.u32 %s6, 4
      %s66 = int_to_ptr.hbm [resolvable:$true] %s65
      %s67 = sshll.u32 [#allocation4], 4
      %s68 = int_to_ptr.vmem [resolvable:$true] %s67
      %70 = dma.hbm_to_vmem [thread:$0]  %s66, 16, %s68, [#allocation5]
    $region29: #{csc_forward.1} parent=1 // pred_fallthru
      _
    // Predicated region
    $region30: #{csc_forward.1} parent=1 // pred_check
      _
    $region31: #{csc_forward.1} parent=1 // pred_check_branch
      %72 = sbr.rel (0) target = $region33
    $region32: #{csc_forward.1} parent=1 // pred_region
      %74 = vsyncadd [#allocation5], 0
      %s75 = sshll.u32 %s7, 4
      %s76 = int_to_ptr.hbm [resolvable:$true] %s75
      %s77 = sshll.u32 [#allocation6], 4
      %s78 = int_to_ptr.vmem [resolvable:$true] %s77
      %83 = dma.hbm_to_vmem [thread:$0]  %s76, 3072, %s78, [#allocation5], 384, 384, 24
    $region33: #{csc_forward.1} parent=1 // pred_fallthru
      _
    // Predicated region
    $region34: #{csc_forward.1} parent=1 // pred_check
      _
    $region35: #{csc_forward.1} parent=1 // pred_check_branch
      %85 = sbr.rel (0) target = $region37
    $region36: #{csc_forward.1} parent=1 // pred_region
      _
    $region37: #{csc_forward.1} parent=1 // pred_fallthru
      _
    // Predicated region
    $region38: #{csc_forward.1} parent=1 // pred_check
      _
    $region39: #{csc_forward.1} parent=1 // pred_check_branch
      %87 = sbr.rel (0) target = $region41
    $region40: #{csc_forward.1} parent=1 // pred_region
      _
    $region41: #{csc_forward.1} parent=1 // pred_fallthru
      _
    // Predicated region
    $region42: #{csc_forward.1} parent=1 // pred_check
      _
    $region43: #{csc_forward.1} parent=1 // pred_check_branch
      %89 = sbr.rel (0) target = $region45
    $region44: #{csc_forward.1} parent=1 // pred_region
      %91 = vsyncadd [#allocation8], 0
      %s92 = sshll.u32 %s10, 4
      %s93 = int_to_ptr.hbm [resolvable:$true] %s92
      %s94 = sshll.u32 [#allocation7], 4
      %s95 = int_to_ptr.vmem [resolvable:$true] %s94
      %100 = dma.hbm_to_vmem [thread:$0]  %s93, 32, %s95, [#allocation8], 16, 16, 1
    $region45: #{csc_forward.1} parent=1 // pred_fallthru
      _
    // Predicated region
    $region46: #{csc_forward.1} parent=1 // pred_check
      _
    $region47: #{csc_forward.1} parent=1 // pred_check_branch
      %102 = sbr.rel (0) target = $region49
    $region48: #{csc_forward.1} parent=1 // pred_region
      %104 = vsyncadd [#allocation8], 0
      %s105 = sshll.u32 %s11, 4
      %s106 = int_to_ptr.hbm [resolvable:$true] %s105
      %s107 = sshll.u32 [#allocation9], 4
      %s108 = int_to_ptr.vmem [resolvable:$true] %s107
      %113 = dma.hbm_to_vmem [thread:$0]  %s106, 32, %s108, [#allocation8], 16, 16, 1
    $region49: #{csc_forward.1} parent=1 // pred_fallthru
      _
    // Predicated region
    $region50: #{csc_forward.1} parent=1 // pred_check
      _
    $region51: #{csc_forward.1} parent=1 // pred_check_branch
      %115 = sbr.rel (0) target = $region53
    $region52: #{csc_forward.1} parent=1 // pred_region
      %117 = vsyncadd [#allocation11], 0
      %s118 = sshll.u32 %s12, 4
      %s119 = int_to_ptr.hbm [resolvable:$true] %s118
      %s120 = sshll.u32 [#allocation10], 4
      %s121 = int_to_ptr.vmem [resolvable:$true] %s120
      %126 = dma.hbm_to_vmem [thread:$0]  %s119, 32, %s121, [#allocation11], 16, 16, 1
    $region53: #{csc_forward.1} parent=1 // pred_fallthru
      _
    // Predicated region
    $region54: #{csc_forward.1} parent=1 // pred_check
      _
    $region55: #{csc_forward.1} parent=1 // pred_check_branch
      %128 = sbr.rel (0) target = $region57
    $region56: #{csc_forward.1} parent=1 // pred_region
      _
    $region57: #{csc_forward.1} parent=1 // pred_fallthru
      _
    // Predicated region
    $region58: #{csc_forward.1} parent=1 // pred_check
      _
    $region59: #{csc_forward.1} parent=1 // pred_check_branch
      %130 = sbr.rel (0) target = $region61
    $region60: #{csc_forward.1} parent=1 // pred_region
      %132 = vsyncadd [#allocation11], 0
      %s133 = sshll.u32 %s14, 4
      %s134 = int_to_ptr.hbm [resolvable:$true] %s133
      %s135 = sshll.u32 [#allocation12], 4
      %s136 = int_to_ptr.vmem [resolvable:$true] %s135
      %141 = dma.hbm_to_vmem [thread:$0]  %s134, 32, %s136, [#allocation11], 16, 16, 1
    $region61: #{csc_forward.1} parent=1 // pred_fallthru
      _
    // Predicated region
    $region62: #{csc_forward.1} parent=1 // pred_check
      _
    $region63: #{csc_forward.1} parent=1 // pred_check_branch
      %143 = sbr.rel (0) target = $region65
    $region64: #{csc_forward.1} parent=1 // pred_region
      _
    $region65: #{csc_forward.1} parent=1 // pred_fallthru
      _
    // Predicated region
    $region66: #{csc_forward.1} parent=1 // pred_check
      _
    $region67: #{csc_forward.1} parent=1 // pred_check_branch
      %145 = sbr.rel (0) target = $region69
    $region68: #{csc_forward.1} parent=1 // pred_region
      %147 = vsyncadd [#allocation14], 0
      %s148 = sshll.u32 %s16, 4
      %s149 = int_to_ptr.hbm [resolvable:$true] %s148
      %s150 = sshll.u32 [#allocation13], 4
      %s151 = int_to_ptr.vmem [resolvable:$true] %s150
      %156 = dma.hbm_to_vmem [thread:$0]  %s149, 32, %s151, [#allocation14], 16, 16, 1
    $region69: #{csc_forward.1} parent=1 // pred_fallthru
      _
    // Predicated region
    $region70: #{csc_forward.1} parent=1 // pred_check
      _
    $region71: #{csc_forward.1} parent=1 // pred_check_branch
      %158 = sbr.rel (0) target = $region73
    $region72: #{csc_forward.1} parent=1 // pred_region
      %160 = vsyncadd [#allocation14], 0
      %s161 = sshll.u32 %s17, 4
      %s162 = int_to_ptr.hbm [resolvable:$true] %s161
      %s163 = sshll.u32 [#allocation15], 4
      %s164 = int_to_ptr.vmem [resolvable:$true] %s163
      %169 = dma.hbm_to_vmem [thread:$0]  %s162, 32, %s164, [#allocation14], 16, 16, 1
    $region73: #{csc_forward.1} parent=1 // pred_fallthru
      _
    // Predicated region
    $region74: #{csc_forward.1} parent=1 // pred_check
      _
    $region75: #{csc_forward.1} parent=1 // pred_check_branch
      %171 = sbr.rel (0) target = $region77
    $region76: #{csc_forward.1} parent=1 // pred_region
      %173 = vsyncadd [#allocation17], 0
      %s174 = sshll.u32 %s18, 4
      %s175 = int_to_ptr.hbm [resolvable:$true] %s174
      %s176 = sshll.u32 [#allocation16], 4
      %s177 = int_to_ptr.vmem [resolvable:$true] %s176
      %182 = dma.hbm_to_vmem [thread:$0]  %s175, 32, %s177, [#allocation17], 16, 16, 1
    $region77: #{csc_forward.1} parent=1 // pred_fallthru
      _
    // Predicated region
    $region78: #{csc_forward.1} parent=1 // pred_check
      _
    $region79: #{csc_forward.1} parent=1 // pred_check_branch
      %184 = sbr.rel (0) target = $region81
    $region80: #{csc_forward.1} parent=1 // pred_region
      _
    $region81: #{csc_forward.1} parent=1 // pred_fallthru
      _
    // Predicated region
    $region82: #{csc_forward.1} parent=1 // pred_check
      _
    $region83: #{csc_forward.1} parent=1 // pred_check_branch
      %186 = sbr.rel (0) target = $region85
    $region84: #{csc_forward.1} parent=1 // pred_region
      _
    $region85: #{csc_forward.1} parent=1 // pred_fallthru
      _
    // Predicated region
    $region86: #{csc_forward.1} parent=1 // pred_check
      _
    $region87: #{csc_forward.1} parent=1 // pred_check_branch
      %188 = sbr.rel (0) target = $region89
    $region88: #{csc_forward.1} parent=1 // pred_region
      _
    $region89: #{csc_forward.1} parent=1 // pred_fallthru
      _
    // Predicated region
    $region90: #{csc_forward.1} parent=1 // pred_check
      _
    $region91: #{csc_forward.1} parent=1 // pred_check_branch
      %190 = sbr.rel (0) target = $region93
    $region92: #{csc_forward.1} parent=1 // pred_region
      %192 = vsyncadd [#allocation17], 0
      %s194 = sshll.u32 %s22, 4
      %s195 = int_to_ptr.hbm [resolvable:$true] %s194
      %s196 = sshll.u32 [#allocation18], 4
      %s197 = int_to_ptr.vmem [resolvable:$true] %s196
      %199 = dma.hbm_to_vmem [thread:$0]  %s195, 16, %s197, [#allocation17]
    $region93: #{csc_forward.1} parent=1 // pred_fallthru
      _
    // Predicated region
    $region94: #{csc_forward.1} parent=1 // pred_check
      _
    $region95: #{csc_forward.1} parent=1 // pred_check_branch
      %201 = sbr.rel (0) target = $region97
    $region96: #{csc_forward.1} parent=1 // pred_region
      %203 = vsyncadd [#allocation20], 0
      %s204 = sshll.u32 %s23, 4
      %s205 = int_to_ptr.hbm [resolvable:$true] %s204
      %s206 = sshll.u32 [#allocation19], 4
      %s207 = int_to_ptr.vmem [resolvable:$true] %s206
      %212 = dma.hbm_to_vmem [thread:$0]  %s205, 256, %s207, [#allocation20], 64, 64, 4
    $region97: #{csc_forward.1} parent=1 // pred_fallthru
      _
    // Predicated region
    $region98: #{csc_forward.1} parent=1 // pred_check
      _
    $region99: #{csc_forward.1} parent=1 // pred_check_branch
      %214 = sbr.rel (0) target = $region101
    $region100: #{csc_forward.1} parent=1 // pred_region
      %216 = vsyncadd [#allocation20], 0
      %s217 = sshll.u32 %s24, 4
      %s218 = int_to_ptr.hbm [resolvable:$true] %s217
      %s219 = sshll.u32 [#allocation21], 4
      %s220 = int_to_ptr.vmem [resolvable:$true] %s219
      %225 = dma.hbm_to_vmem [thread:$0]  %s218, 256, %s220, [#allocation20], 64, 64, 4
    $region101: #{csc_forward.1} parent=1 // pred_fallthru
      _
    // Predicated region
    $region102: #{csc_forward.1} parent=1 // pred_check
      _
    $region103: #{csc_forward.1} parent=1 // pred_check_branch
      %227 = sbr.rel (0) target = $region105
    $region104: #{csc_forward.1} parent=1 // pred_region
      %229 = vsyncadd [#allocation23], 0
      %s231 = sshll.u32 %s25, 4
      %s232 = int_to_ptr.hbm [resolvable:$true] %s231
      %s233 = sshll.u32 [#allocation22], 4
      %s234 = int_to_ptr.vmem [resolvable:$true] %s233
      %236 = dma.hbm_to_vmem [thread:$0]  %s232, 16, %s234, [#allocation23]
    $region105: #{csc_forward.1} parent=1 // pred_fallthru
      _
    // Predicated region
    $region106: #{csc_forward.1} parent=1 // pred_check
      _
    $region107: #{csc_forward.1} parent=1 // pred_check_branch
      %238 = sbr.rel (0) target = $region109
    $region108: #{csc_forward.1} parent=1 // pred_region
      %240 = dma.done [#allocation3], 16
    $region109: #{csc_forward.1} parent=1 // pred_fallthru
      _
    // Predicated region
    $region110: #{csc_forward.1} parent=1 // pred_check
      _
    $region111: #{csc_forward.1} parent=1 // pred_check_branch
      %242 = sbr.rel (0) target = $region113
    $region112: #{csc_forward.1} parent=1 // pred_region
      %244 = dma.done [#allocation5], 16
    $region113: #{csc_forward.1} parent=1 // pred_fallthru
      _
    // Predicated region
    $region114: #{csc_forward.1} parent=1 // pred_check
      _
    $region115: #{csc_forward.1} parent=1 // pred_check_branch
      %246 = sbr.rel (0) target = $region117
    $region116: #{csc_forward.1} parent=1 // pred_region
      %248 = dma.done [#allocation5], 3072
    $region117: #{csc_forward.1} parent=1 // pred_fallthru
      _
    // Predicated region
    $region118: #{csc_forward.1} parent=1 // pred_check
      _
    $region119: #{csc_forward.1} parent=1 // pred_check_branch
      %250 = sbr.rel (0) target = $region121
    $region120: #{csc_forward.1} parent=1 // pred_region
      %252 = dma.done [#allocation8], 32
    $region121: #{csc_forward.1} parent=1 // pred_fallthru
      _
    // Predicated region
    $region122: #{csc_forward.1} parent=1 // pred_check
      _
    $region123: #{csc_forward.1} parent=1 // pred_check_branch
      %254 = sbr.rel (0) target = $region125
    $region124: #{csc_forward.1} parent=1 // pred_region
      %256 = dma.done [#allocation8], 32
    $region125: #{csc_forward.1} parent=1 // pred_fallthru
      _
    // Predicated region
    $region126: #{csc_forward.1} parent=1 // pred_check
      _
    $region127: #{csc_forward.1} parent=1 // pred_check_branch
      %258 = sbr.rel (0) target = $region129
    $region128: #{csc_forward.1} parent=1 // pred_region
      %260 = dma.done [#allocation11], 32
    $region129: #{csc_forward.1} parent=1 // pred_fallthru
      _
    // Predicated region
    $region130: #{csc_forward.1} parent=1 // pred_check
      _
    $region131: #{csc_forward.1} parent=1 // pred_check_branch
      %262 = sbr.rel (0) target = $region133
    $region132: #{csc_forward.1} parent=1 // pred_region
      %264 = dma.done [#allocation11], 32
    $region133: #{csc_forward.1} parent=1 // pred_fallthru
      _
    // Predicated region
    $region134: #{csc_forward.1} parent=1 // pred_check
      _
    $region135: #{csc_forward.1} parent=1 // pred_check_branch
      %266 = sbr.rel (0) target = $region137
    $region136: #{csc_forward.1} parent=1 // pred_region
      %268 = dma.done [#allocation14], 32
    $region137: #{csc_forward.1} parent=1 // pred_fallthru
      _
    // Predicated region
    $region138: #{csc_forward.1} parent=1 // pred_check
      _
    $region139: #{csc_forward.1} parent=1 // pred_check_branch
      %270 = sbr.rel (0) target = $region141
    $region140: #{csc_forward.1} parent=1 // pred_region
      %272 = dma.done [#allocation14], 32
    $region141: #{csc_forward.1} parent=1 // pred_fallthru
      _
    // Predicated region
    $region142: #{csc_forward.1} parent=1 // pred_check
      _
    $region143: #{csc_forward.1} parent=1 // pred_check_branch
      %274 = sbr.rel (0) target = $region145
    $region144: #{csc_forward.1} parent=1 // pred_region
      %276 = dma.done [#allocation17], 32
    $region145: #{csc_forward.1} parent=1 // pred_fallthru
      _
    // Predicated region
    $region146: #{csc_forward.1} parent=1 // pred_check
      _
    $region147: #{csc_forward.1} parent=1 // pred_check_branch
      %278 = sbr.rel (0) target = $region149
    $region148: #{csc_forward.1} parent=1 // pred_region
      %280 = dma.done [#allocation17], 16
    $region149: #{csc_forward.1} parent=1 // pred_fallthru
      _
    // Predicated region
    $region150: #{csc_forward.1} parent=1 // pred_check
      _
    $region151: #{csc_forward.1} parent=1 // pred_check_branch
      %282 = sbr.rel (0) target = $region153
    $region152: #{csc_forward.1} parent=1 // pred_region
      %284 = dma.done [#allocation20], 256
    $region153: #{csc_forward.1} parent=1 // pred_fallthru
      _
    // Predicated region
    $region154: #{csc_forward.1} parent=1 // pred_check
      _
    $region155: #{csc_forward.1} parent=1 // pred_check_branch
      %286 = sbr.rel (0) target = $region157
    $region156: #{csc_forward.1} parent=1 // pred_region
      %288 = dma.done [#allocation20], 256
    $region157: #{csc_forward.1} parent=1 // pred_fallthru
      _
    // Predicated region
    $region158: #{csc_forward.1} parent=1 // pred_check
      _
    $region159: #{csc_forward.1} parent=1 // pred_check_branch
      %290 = sbr.rel (0) target = $region161
    $region160: #{csc_forward.1} parent=1 // pred_region
      %292 = dma.done [#allocation23], 16
    $region161: #{csc_forward.1} parent=1 // pred_fallthru
      _
    %v294 = vld [vmem:[%s0] sm:$0xff]
    %v295 = vld [vmem:[%s0 + $0x8] sm:$0xff]
    %v296 = vlaneseq
    %v297 = vand.u32 %v296, 127
    %298 = vset.pattern.permute.xlu0 0
    %299 = vperm.xlu0 %298, %v294
    %v300 = vpop.permute.xlu0 %299
    %301 = vset.pattern.permute.xlu0 0
    %302 = vperm.xlu0 %301, %v295
    %v303 = vpop.permute.xlu0 %302
    %vm304 = vcmp.eq.s32.totalorder %v300, %v297
    %vm305 = vcmp.eq.s32.totalorder %v303, %v297
    %v306 = vsel %vm304, 1.0, 0.0
    %v307 = vsel %vm305, 1.0, 0.0
    %v308 = vpack.c.bf16 %v307, %v306
    %v309 = vld [vmem:[%s3] sm:$0xf]
    %v310 = vld [vmem:[%s3 + $0x4] sm:$0xf]
    %v311 = vld [vmem:[%s3 + $0x8] sm:$0xf]
    %v312 = vld [vmem:[%s3 + $0xc] sm:$0xf]
    %v313 = vld [vmem:[%s3 + $0x10] sm:$0xf]
    %v314 = vld [vmem:[%s3 + $0x14] sm:$0xf]
    %v315 = vld [vmem:[%s3 + $0x18] sm:$0xf]
    %v316 = vld [vmem:[%s3 + $0x1c] sm:$0xf]
    %v317 = vld [vmem:[%s4] sm:$0xff]
    %v318 = vld [vmem:[%s4 + $0x8] sm:$0xff]
    %v327 = vunpack.c.l.b16 %v309
    %v328 = vunpack.c.l.b16 %v310
    %v329 = vunpack.c.l.b16 %v311
    %v330 = vunpack.c.l.b16 %v312
    %v331 = vunpack.c.l.b16 %v313
    %v332 = vunpack.c.l.b16 %v314
    %v333 = vunpack.c.l.b16 %v315
    %v334 = vunpack.c.l.b16 %v316
    %v335 = vpack.c.b16 %v328, %v327
    %v336 = vpack.c.b16 %v330, %v329
    %v337 = vpack.c.b16 %v332, %v331
    %v338 = vpack.c.b16 %v334, %v333
    %vm343 = vcmask 523264
    %v345 = vsel %vm343, %v308, 0
    %347 = vmatpush.bf16.msra.mxu0 0
    %348 = vmatpush.bf16.msra.mxu0 0
    %349 = vmatpush.bf16.msra.mxu0 0
    %350 = vmatpush.bf16.msra.mxu0 0
    %351 = vmatpush.bf16.msra.mxu0 %v338
    %352 = vmatpush.bf16.msra.mxu0 %v337
    %353 = vmatpush.bf16.msra.mxu0 %v336
    %354 = vmatpush.bf16.msra.mxu0 %v335
    %355 = vmatmul.bf16.gmra.mxu0 %v345
    %v356 = vpop.f32.mrf.mxu0
    %v357 = vadd.f32 %v317, %v356
    %v358 = vpop.f32.mrf.mxu0
    %v359 = vadd.f32 %v318, %v358
    %360 = vdwg.mxu0
    %v361 = vld [vmem:[#allocation2] sm:$0x1]
    %v362 = vld [vmem:[#allocation4] sm:$0x1]
    %vm363 = vcmask 261120
    %v364 = vsel %vm363, %v357, 0.0
    %365 = vadd.xlane.f32.xlu0 %v364
    %v366 = vpop.xlane.xlu0 %365
    %v367 = vsel %vm363, %v359, 0.0
    %368 = vadd.xlane.f32.xlu0 %v367
    %v369 = vpop.xlane.xlu0 %368
    %v370 = vrcp.pop 32.0
    %v371 = vmul.f32 32.0, %v370
    %v372 = vsub.f32 1.0, %v371
    %v373 = vmul.f32 %v370, %v372
    %v374 = vadd.f32 %v370, %v373
    %vm375 = vweird.f32 %v370
    %v376 = vsel %vm375, %v370, %v374
    %v377 = vmul.f32 %v366, %v376
    %v378 = vmul.f32 %v369, %v376
    %v379 = vsub.f32 %v357, %v377
    %v380 = vsub.f32 %v359, %v378
    %v381 = vmul.f32 %v379, %v379
    %v382 = vmul.f32 %v380, %v380
    %v383 = vsel %vm363, %v381, 0.0
    %384 = vadd.xlane.f32.xlu0 %v383
    %v385 = vpop.xlane.xlu0 %384
    %v386 = vsel %vm363, %v382, 0.0
    %387 = vadd.xlane.f32.xlu0 %v386
    %v388 = vpop.xlane.xlu0 %387
    %v389 = vmul.f32 %v385, %v376
    %v390 = vmul.f32 %v388, %v376
    %v391 = vadd.f32 %v389, 1e-12
    %v392 = vadd.f32 %v390, 1e-12
    %v393 = vrsqrt.pop %v391
    %v394 = vmul.f32 %v393, %v391
    %v395 = vmul.f32 %v394, %v393
    %v396 = vmul.f32 0.5, %v395
    %v397 = vsub.f32 1.5, %v396
    %v398 = vmul.f32 %v393, %v397
    %vm399 = vweird.f32 %v391
    %vm400 = vweird.f32 %v393
    %vm401 = vmor %vm399, %vm400
    %v402 = vsel %vm401, %v393, %v398
    %v403 = vrsqrt.pop %v392
    %v404 = vmul.f32 %v403, %v392
    %v405 = vmul.f32 %v404, %v403
    %v406 = vmul.f32 0.5, %v405
    %v407 = vsub.f32 1.5, %v406
    %v408 = vmul.f32 %v403, %v407
    %vm409 = vweird.f32 %v392
    %vm410 = vweird.f32 %v403
    %vm411 = vmor %vm409, %vm410
    %v412 = vsel %vm411, %v403, %v408
    %v413 = vmul.f32 %v379, %v402
    %v414 = vmul.f32 %v380, %v412
    %v416 = vperm.slane %v361, 0
    %v418 = vmul.f32 %v413, %v416
    %v419 = vmul.f32 %v414, %v416
    %v421 = vperm.slane %v362, 0
    %v423 = vadd.f32 %v418, %v421
    %v424 = vadd.f32 %v419, %v421
    %v425 = vld [vmem:[%s1] sm:$0x1]
    %v426 = vcvt.s32.f32 %v425
    %v427 = vld [vmem:[%s2] sm:$0xff]
    %v428 = vld [vmem:[%s2 + $0x8] sm:$0xff]
    %v429 = vsub.f32 1.0, %v426
    %v430 = vmul.f32 %v429, -1e+09
    %v432 = vperm.slane %v430, 0
    %v434 = vadd.f32 %v427, %v432
    %v435 = vadd.f32 %v428, %v432
    %v436 = vpack.c.bf16 %v424, %v423
    %v437 = vld [vmem:[#allocation6] sm:$0xff]
    %v438 = vld [vmem:[#allocation6 + $0x8] sm:$0xff]
    %v439 = vld [vmem:[#allocation6 + $0x10] sm:$0xff]
    %v440 = vld [vmem:[#allocation6 + $0x18] sm:$0xff]
    %v441 = vld [vmem:[#allocation6 + $0x20] sm:$0xff]
    %v442 = vld [vmem:[#allocation6 + $0x28] sm:$0xff]
    %v443 = vld [vmem:[#allocation6 + $0x30] sm:$0xff]
    %v444 = vld [vmem:[#allocation6 + $0x38] sm:$0xff]
    %v445 = vld [vmem:[#allocation6 + $0x40] sm:$0xff]
    %v446 = vld [vmem:[#allocation6 + $0x48] sm:$0xff]
    %v447 = vld [vmem:[#allocation6 + $0x50] sm:$0xff]
    %v448 = vld [vmem:[#allocation6 + $0x58] sm:$0xff]
    %v449 = vld [vmem:[%s8] sm:$0x3f]
    %v451 = vperm.slane %v449, 0
    %v452 = vperm.slane %v449, 1
    %v453 = vperm.slane %v449, 2
    %v454 = vperm.slane %v449, 3
    %v455 = vperm.slane %v449, 4
    %v456 = vperm.slane %v449, 5
    %v475 = vunpack.c.l.b16 %v437
    %v476 = vunpack.c.h.b16 %v437
    %v477 = vunpack.c.l.b16 %v438
    %v478 = vunpack.c.h.b16 %v438
    %v479 = vunpack.c.l.b16 %v439
    %v480 = vunpack.c.h.b16 %v439
    %v481 = vunpack.c.l.b16 %v440
    %v482 = vunpack.c.h.b16 %v440
    %v483 = vunpack.c.l.b16 %v441
    %v484 = vunpack.c.h.b16 %v441
    %v485 = vunpack.c.l.b16 %v442
    %v486 = vunpack.c.h.b16 %v442
    %v487 = vunpack.c.l.b16 %v443
    %v488 = vunpack.c.h.b16 %v443
    %v489 = vunpack.c.l.b16 %v444
    %v490 = vunpack.c.h.b16 %v444
    %v491 = vunpack.c.l.b16 %v445
    %v492 = vunpack.c.h.b16 %v445
    %v493 = vunpack.c.l.b16 %v446
    %v494 = vunpack.c.h.b16 %v446
    %v495 = vunpack.c.l.b16 %v447
    %v496 = vunpack.c.h.b16 %v447
    %v497 = vunpack.c.l.b16 %v448
    %v498 = vunpack.c.h.b16 %v448
    %v499 = vpack.c.b16 %v481, %v475
    %v500 = vpack.c.b16 %v482, %v476
    %v501 = vpack.c.b16 %v483, %v477
    %v502 = vpack.c.b16 %v484, %v478
    %v503 = vpack.c.b16 %v485, %v479
    %v504 = vpack.c.b16 %v486, %v480
    %v505 = vpack.c.b16 %v493, %v487
    %v506 = vpack.c.b16 %v494, %v488
    %v507 = vpack.c.b16 %v495, %v489
    %v508 = vpack.c.b16 %v496, %v490
    %v509 = vpack.c.b16 %v497, %v491
    %v510 = vpack.c.b16 %v498, %v492
    %v524 = vsel %vm363, %v436, 0
    %526 = vmatpush.bf16.msra.mxu0 0
    %527 = vmatpush.bf16.msra.mxu0 0
    %528 = vmatpush.bf16.msra.mxu0 0
    %529 = vmatpush.bf16.msra.mxu0 0
    %530 = vmatpush.bf16.msra.mxu0 0
    %531 = vmatpush.bf16.msra.mxu0 0
    %532 = vmatpush.bf16.msra.mxu0 %v505
    %533 = vmatpush.bf16.msra.mxu0 %v499
    %534 = vmatmul.bf16.gmra.mxu0 %v524
    %v535 = vpop.f32.mrf.mxu0
    %v536 = vadd.f32 %v451, %v535
    %v537 = vpop.f32.mrf.mxu0
    %v538 = vadd.f32 %v451, %v537
    %539 = vdwg.mxu0
    %540 = vmatpush.bf16.msra.mxu0 0
    %541 = vmatpush.bf16.msra.mxu0 0
    %542 = vmatpush.bf16.msra.mxu0 0
    %543 = vmatpush.bf16.msra.mxu0 0
    %544 = vmatpush.bf16.msra.mxu0 0
    %545 = vmatpush.bf16.msra.mxu0 0
    %546 = vmatpush.bf16.msra.mxu0 %v506
    %547 = vmatpush.bf16.msra.mxu0 %v500
    %548 = vmatmul.bf16.gmra.mxu0 %v524
    %v549 = vpop.f32.mrf.mxu0
    %v550 = vadd.f32 %v452, %v549
    %v551 = vpop.f32.mrf.mxu0
    %v552 = vadd.f32 %v452, %v551
    %553 = vdwg.mxu0
    %554 = vmatpush.bf16.msra.mxu0 0
    %555 = vmatpush.bf16.msra.mxu0 0
    %556 = vmatpush.bf16.msra.mxu0 0
    %557 = vmatpush.bf16.msra.mxu0 0
    %558 = vmatpush.bf16.msra.mxu0 0
    %559 = vmatpush.bf16.msra.mxu0 0
    %560 = vmatpush.bf16.msra.mxu0 %v507
    %561 = vmatpush.bf16.msra.mxu0 %v501
    %562 = vmatmul.bf16.gmra.mxu0 %v524
    %v563 = vpop.f32.mrf.mxu0
    %v564 = vadd.f32 %v453, %v563
    %v565 = vpop.f32.mrf.mxu0
    %v566 = vadd.f32 %v453, %v565
    %567 = vdwg.mxu0
    %568 = vmatpush.bf16.msra.mxu0 0
    %569 = vmatpush.bf16.msra.mxu0 0
    %570 = vmatpush.bf16.msra.mxu0 0
    %571 = vmatpush.bf16.msra.mxu0 0
    %572 = vmatpush.bf16.msra.mxu0 0
    %573 = vmatpush.bf16.msra.mxu0 0
    %574 = vmatpush.bf16.msra.mxu0 %v508
    %575 = vmatpush.bf16.msra.mxu0 %v502
    %576 = vmatmul.bf16.gmra.mxu0 %v524
    %v577 = vpop.f32.mrf.mxu0
    %v578 = vadd.f32 %v454, %v577
    %v579 = vpop.f32.mrf.mxu0
    %v580 = vadd.f32 %v454, %v579
    %581 = vdwg.mxu0
    %582 = vmatpush.bf16.msra.mxu0 0
    %583 = vmatpush.bf16.msra.mxu0 0
    %584 = vmatpush.bf16.msra.mxu0 0
    %585 = vmatpush.bf16.msra.mxu0 0
    %586 = vmatpush.bf16.msra.mxu0 0
    %587 = vmatpush.bf16.msra.mxu0 0
    %588 = vmatpush.bf16.msra.mxu0 %v509
    %589 = vmatpush.bf16.msra.mxu0 %v503
    %590 = vmatmul.bf16.gmra.mxu0 %v524
    %v591 = vpop.f32.mrf.mxu0
    %v592 = vadd.f32 %v455, %v591
    %v593 = vpop.f32.mrf.mxu0
    %v594 = vadd.f32 %v455, %v593
    %595 = vdwg.mxu0
    %596 = vmatpush.bf16.msra.mxu0 0
    %597 = vmatpush.bf16.msra.mxu0 0
    %598 = vmatpush.bf16.msra.mxu0 0
    %599 = vmatpush.bf16.msra.mxu0 0
    %600 = vmatpush.bf16.msra.mxu0 0
    %601 = vmatpush.bf16.msra.mxu0 0
    %602 = vmatpush.bf16.msra.mxu0 %v510
    %603 = vmatpush.bf16.msra.mxu0 %v504
    %604 = vmatmul.bf16.gmra.mxu0 %v524
    %v605 = vpop.f32.mrf.mxu0
    %v606 = vadd.f32 %v456, %v605
    %v607 = vpop.f32.mrf.mxu0
    %v608 = vadd.f32 %v456, %v607
    %609 = vdwg.mxu0
    %v610 = vld [vmem:[%s9] sm:$0xf]
    %v611 = vld [vmem:[%s9 + $0x4] sm:$0xf]
    %v612 = vld [vmem:[%s9 + $0x8] sm:$0xf]
    %v613 = vld [vmem:[%s9 + $0xc] sm:$0xf]
    %v614 = vpack.c.bf16 %v538, %v536
    %v615 = vpack.c.bf16 %v566, %v564
    %v616 = vpack.c.bf16 %v594, %v592
    %vm617 = vcmask 130048
    %v619 = vsel %vm617, %v614, 0
    %v622 = vsel %vm617, %v615, 0
    %624 = vmatpush.bf16.xpose.msra.mxu0 0
    %625 = vmatpush.bf16.xpose.msra.mxu0 0
    %626 = vmatpush.bf16.xpose.msra.mxu0 0
    %627 = vmatpush.bf16.xpose.msra.mxu0 0
    %628 = vmatpush.bf16.xpose.msra.mxu0 0
    %629 = vmatpush.bf16.xpose.msra.mxu0 0
    %630 = vmatpush.bf16.xpose.msra.mxu0 0
    %631 = vmatpush.bf16.xpose.msra.mxu0 %v622
    %632 = vmatmul.bf16.gmra.mxu0 %v619
    %v633 = vpop.f32.mrf.mxu0
    %v634 = vadd.f32 %v434, %v633
    %v635 = vpop.f32.mrf.mxu0
    %v636 = vadd.f32 %v435, %v635
    %637 = vdwg.mxu0
    %v638 = vsel %vm617, %v634, -inf
    %639 = vmax.xlane.f32.xlu0 %v638
    %v640 = vpop.xlane.xlu0 %639
    %v641 = vsel %vm617, %v636, -inf
    %642 = vmax.xlane.f32.xlu0 %v641
    %v643 = vpop.xlane.xlu0 %642
    %v644 = vsub.f32 %v634, %v640
    %v645 = vsub.f32 %v636, %v643
    %v646 = vmul.f32 %v644, 1.442695
    %v647 = vpow.pop %v646
    %v648 = vmul.f32 %v645, 1.442695
    %v649 = vpow.pop %v648
    %v650 = vsel %vm617, %v647, 0.0
    %651 = vadd.xlane.f32.xlu0 %v650
    %v652 = vpop.xlane.xlu0 %651
    %v653 = vsel %vm617, %v649, 0.0
    %654 = vadd.xlane.f32.xlu0 %v653
    %v655 = vpop.xlane.xlu0 %654
    %v656 = vrcp.pop %v652
    %v657 = vrcp.pop %v655
    %v658 = vmul.f32 %v647, %v656
    %v659 = vmul.f32 %v649, %v657
    %v660 = vpack.c.bf16 %v659, %v658
    %v662 = vsel %vm617, %v660, 0
    %664 = vmatpush.bf16.msra.mxu0 0
    %665 = vmatpush.bf16.msra.mxu0 0
    %666 = vmatpush.bf16.msra.mxu0 0
    %667 = vmatpush.bf16.msra.mxu0 0
    %668 = vmatpush.bf16.msra.mxu0 0
    %669 = vmatpush.bf16.msra.mxu0 0
    %670 = vmatpush.bf16.msra.mxu0 0
    %671 = vmatpush.bf16.msra.mxu0 %v616
    %672 = vmatmul.bf16.gmra.mxu0 %v662
    %v673 = vpop.f32.mrf.mxu0
    %v674 = vadd.f32 0.0, %v673
    %v675 = vpop.f32.mrf.mxu0
    %v676 = vadd.f32 0.0, %v675
    %677 = vdwg.mxu0
    %v678 = vpack.c.bf16 %v676, %v674
    %v679 = vpack.c.bf16 %v552, %v550
    %v680 = vpack.c.bf16 %v580, %v578
    %v681 = vpack.c.bf16 %v608, %v606
    %v683 = vsel %vm617, %v679, 0
    %v686 = vsel %vm617, %v680, 0
    %688 = vmatpush.bf16.xpose.msra.mxu0 0
    %689 = vmatpush.bf16.xpose.msra.mxu0 0
    %690 = vmatpush.bf16.xpose.msra.mxu0 0
    %691 = vmatpush.bf16.xpose.msra.mxu0 0
    %692 = vmatpush.bf16.xpose.msra.mxu0 0
    %693 = vmatpush.bf16.xpose.msra.mxu0 0
    %694 = vmatpush.bf16.xpose.msra.mxu0 0
    %695 = vmatpush.bf16.xpose.msra.mxu0 %v686
    %696 = vmatmul.bf16.gmra.mxu0 %v683
    %v697 = vpop.f32.mrf.mxu0
    %v698 = vadd.f32 %v434, %v697
    %v699 = vpop.f32.mrf.mxu0
    %v700 = vadd.f32 %v435, %v699
    %701 = vdwg.mxu0
    %v702 = vsel %vm617, %v698, -inf
    %703 = vmax.xlane.f32.xlu0 %v702
    %v704 = vpop.xlane.xlu0 %703
    %v705 = vsel %vm617, %v700, -inf
    %706 = vmax.xlane.f32.xlu0 %v705
    %v707 = vpop.xlane.xlu0 %706
    %v708 = vsub.f32 %v698, %v704
    %v709 = vsub.f32 %v700, %v707
    %v710 = vmul.f32 %v708, 1.442695
    %v711 = vpow.pop %v710
    %v712 = vmul.f32 %v709, 1.442695
    %v713 = vpow.pop %v712
    %v714 = vsel %vm617, %v711, 0.0
    %715 = vadd.xlane.f32.xlu0 %v714
    %v716 = vpop.xlane.xlu0 %715
    %v717 = vsel %vm617, %v713, 0.0
    %718 = vadd.xlane.f32.xlu0 %v717
    %v719 = vpop.xlane.xlu0 %718
    %v720 = vrcp.pop %v716
    %v721 = vrcp.pop %v719
    %v722 = vmul.f32 %v711, %v720
    %v723 = vmul.f32 %v713, %v721
    %v724 = vpack.c.bf16 %v723, %v722
    %v726 = vsel %vm617, %v724, 0
    %728 = vmatpush.bf16.msra.mxu0 0
    %729 = vmatpush.bf16.msra.mxu0 0
    %730 = vmatpush.bf16.msra.mxu0 0
    %731 = vmatpush.bf16.msra.mxu0 0
    %732 = vmatpush.bf16.msra.mxu0 0
    %733 = vmatpush.bf16.msra.mxu0 0
    %734 = vmatpush.bf16.msra.mxu0 0
    %735 = vmatpush.bf16.msra.mxu0 %v681
    %736 = vmatmul.bf16.gmra.mxu0 %v726
    %v737 = vpop.f32.mrf.mxu0
    %v738 = vadd.f32 0.0, %v737
    %v739 = vpop.f32.mrf.mxu0
    %v740 = vadd.f32 0.0, %v739
    %741 = vdwg.mxu0
    %v742 = vpack.c.bf16 %v740, %v738
    %v745 = vunpack.c.l.b16 %v612
    %v746 = vunpack.c.l.b16 %v613
    %v747 = vpack.c.b16 %v746, %v745
    %v750 = vsel %vm617, %v742, 0
    %752 = vmatpush.bf16.msra.mxu0 0
    %753 = vmatpush.bf16.msra.mxu0 0
    %754 = vmatpush.bf16.msra.mxu0 0
    %755 = vmatpush.bf16.msra.mxu0 0
    %756 = vmatpush.bf16.msra.mxu0 0
    %757 = vmatpush.bf16.msra.mxu0 0
    %758 = vmatpush.bf16.msra.mxu0 0
    %759 = vmatpush.bf16.msra.mxu0 %v747
    %760 = vmatmul.bf16.gmra.mxu0 %v750
    %v761 = vpop.f32.mrf.mxu0
    %v762 = vadd.f32 0.0, %v761
    %v763 = vpop.f32.mrf.mxu0
    %v764 = vadd.f32 0.0, %v763
    %765 = vdwg.mxu0
    %v768 = vunpack.c.l.b16 %v610
    %v769 = vunpack.c.l.b16 %v611
    %v770 = vpack.c.b16 %v769, %v768
    %v773 = vsel %vm617, %v678, 0
    %775 = vmatpush.bf16.msra.mxu0 0
    %776 = vmatpush.bf16.msra.mxu0 0
    %777 = vmatpush.bf16.msra.mxu0 0
    %778 = vmatpush.bf16.msra.mxu0 0
    %779 = vmatpush.bf16.msra.mxu0 0
    %780 = vmatpush.bf16.msra.mxu0 0
    %781 = vmatpush.bf16.msra.mxu0 0
    %782 = vmatpush.bf16.msra.mxu0 %v770
    %783 = vmatmul.bf16.gmra.mxu0 %v773
    %v784 = vpop.f32.mrf.mxu0
    %v785 = vadd.f32 %v762, %v784
    %v786 = vpop.f32.mrf.mxu0
    %v787 = vadd.f32 %v764, %v786
    %788 = vdwg.mxu0
    %v789 = vld [vmem:[#allocation7] sm:$0x1]
    %v791 = vperm.slane %v789, 0
    %v793 = vadd.f32 %v785, %v791
    %v794 = vadd.f32 %v787, %v791
    %v795 = vadd.f32 %v793, %v423
    %v796 = vadd.f32 %v794, %v424
    %v797 = vld [vmem:[#allocation9] sm:$0x1]
    %v798 = vld [vmem:[#allocation10] sm:$0x1]
    %v799 = vsel %vm363, %v795, 0.0
    %800 = vadd.xlane.f32.xlu0 %v799
    %v801 = vpop.xlane.xlu0 %800
    %v802 = vsel %vm363, %v796, 0.0
    %803 = vadd.xlane.f32.xlu0 %v802
    %v804 = vpop.xlane.xlu0 %803
    %v805 = vmul.f32 %v801, %v376
    %v806 = vmul.f32 %v804, %v376
    %v807 = vsub.f32 %v795, %v805
    %v808 = vsub.f32 %v796, %v806
    %v809 = vmul.f32 %v807, %v807
    %v810 = vmul.f32 %v808, %v808
    %v811 = vsel %vm363, %v809, 0.0
    %812 = vadd.xlane.f32.xlu0 %v811
    %v813 = vpop.xlane.xlu0 %812
    %v814 = vsel %vm363, %v810, 0.0
    %815 = vadd.xlane.f32.xlu0 %v814
    %v816 = vpop.xlane.xlu0 %815
    %v817 = vmul.f32 %v813, %v376
    %v818 = vmul.f32 %v816, %v376
    %v819 = vadd.f32 %v817, 1e-12
    %v820 = vadd.f32 %v818, 1e-12
    %v821 = vrsqrt.pop %v819
    %v822 = vmul.f32 %v821, %v819
    %v823 = vmul.f32 %v822, %v821
    %v824 = vmul.f32 0.5, %v823
    %v825 = vsub.f32 1.5, %v824
    %v826 = vmul.f32 %v821, %v825
    %vm827 = vweird.f32 %v819
    %vm828 = vweird.f32 %v821
    %vm829 = vmor %vm827, %vm828
    %v830 = vsel %vm829, %v821, %v826
    %v831 = vrsqrt.pop %v820
    %v832 = vmul.f32 %v831, %v820
    %v833 = vmul.f32 %v832, %v831
    %v834 = vmul.f32 0.5, %v833
    %v835 = vsub.f32 1.5, %v834
    %v836 = vmul.f32 %v831, %v835
    %vm837 = vweird.f32 %v820
    %vm838 = vweird.f32 %v831
    %vm839 = vmor %vm837, %vm838
    %v840 = vsel %vm839, %v831, %v836
    %v841 = vmul.f32 %v807, %v830
    %v842 = vmul.f32 %v808, %v840
    %v844 = vperm.slane %v797, 0
    %v846 = vmul.f32 %v841, %v844
    %v847 = vmul.f32 %v842, %v844
    %v849 = vperm.slane %v798, 0
    %v851 = vadd.f32 %v846, %v849
    %v852 = vadd.f32 %v847, %v849
    %v853 = vpack.c.bf16 %v852, %v851
    %v854 = vld [vmem:[%s13] sm:$0xf]
    %v855 = vld [vmem:[%s13 + $0x4] sm:$0xf]
    %v856 = vld [vmem:[%s13 + $0x8] sm:$0xf]
    %v857 = vld [vmem:[%s13 + $0xc] sm:$0xf]
    %v858 = vld [vmem:[#allocation12] sm:$0x1]
    %v860 = vperm.slane %v858, 0
    %v866 = vunpack.c.l.b16 %v854
    %v867 = vunpack.c.l.b16 %v855
    %v868 = vunpack.c.l.b16 %v856
    %v869 = vunpack.c.l.b16 %v857
    %v870 = vpack.c.b16 %v867, %v866
    %v871 = vpack.c.b16 %v869, %v868
    %v875 = vsel %vm363, %v853, 0
    %877 = vmatpush.bf16.msra.mxu0 0
    %878 = vmatpush.bf16.msra.mxu0 0
    %879 = vmatpush.bf16.msra.mxu0 0
    %880 = vmatpush.bf16.msra.mxu0 0
    %881 = vmatpush.bf16.msra.mxu0 0
    %882 = vmatpush.bf16.msra.mxu0 0
    %883 = vmatpush.bf16.msra.mxu0 %v871
    %884 = vmatpush.bf16.msra.mxu0 %v870
    %885 = vmatmul.bf16.gmra.mxu0 %v875
    %v886 = vpop.f32.mrf.mxu0
    %v887 = vadd.f32 %v860, %v886
    %v888 = vpop.f32.mrf.mxu0
    %v889 = vadd.f32 %v860, %v888
    %890 = vdwg.mxu0
    %v891 = vmul.f32 %v887, %v887
    %v892 = vmul.f32 %v889, %v889
    %v893 = vmul.f32 %v887, %v891
    %v894 = vmul.f32 %v889, %v892
    %v895 = vmul.f32 %v893, 0.044715
    %v896 = vmul.f32 %v894, 0.044715
    %v897 = vadd.f32 %v887, %v895
    %v898 = vadd.f32 %v889, %v896
    %v899 = vmul.f32 %v897, 0.7978846
    %v900 = vmul.f32 %v898, 0.7978846
    %v901 = vtanh.pop %v899
    %v902 = vtanh.pop %v900
    %v903 = vadd.f32 %v901, 1.0
    %v904 = vadd.f32 %v902, 1.0
    %v905 = vmul.f32 %v903, 0.5
    %v906 = vmul.f32 %v904, 0.5
    %v907 = vmul.f32 %v887, %v905
    %v908 = vmul.f32 %v889, %v906
    %v909 = vpack.c.bf16 %v908, %v907
    %v910 = vld [vmem:[%s15] sm:$0xf]
    %v911 = vld [vmem:[%s15 + $0x4] sm:$0xf]
    %v912 = vld [vmem:[%s15 + $0x8] sm:$0xf]
    %v913 = vld [vmem:[%s15 + $0xc] sm:$0xf]
    %v914 = vld [vmem:[%s15 + $0x10] sm:$0xf]
    %v915 = vld [vmem:[%s15 + $0x14] sm:$0xf]
    %v916 = vld [vmem:[%s15 + $0x18] sm:$0xf]
    %v917 = vld [vmem:[%s15 + $0x1c] sm:$0xf]
    %v918 = vld [vmem:[#allocation13] sm:$0x1]
    %v920 = vperm.slane %v918, 0
    %v930 = vunpack.c.l.b16 %v910
    %v931 = vunpack.c.l.b16 %v911
    %v932 = vunpack.c.l.b16 %v912
    %v933 = vunpack.c.l.b16 %v913
    %v934 = vunpack.c.l.b16 %v914
    %v935 = vunpack.c.l.b16 %v915
    %v936 = vunpack.c.l.b16 %v916
    %v937 = vunpack.c.l.b16 %v917
    %v938 = vpack.c.b16 %v931, %v930
    %v939 = vpack.c.b16 %v933, %v932
    %v940 = vpack.c.b16 %v935, %v934
    %v941 = vpack.c.b16 %v937, %v936
    %v947 = vsel %vm343, %v909, 0
    %949 = vmatpush.bf16.msra.mxu0 0
    %950 = vmatpush.bf16.msra.mxu0 0
    %951 = vmatpush.bf16.msra.mxu0 0
    %952 = vmatpush.bf16.msra.mxu0 0
    %953 = vmatpush.bf16.msra.mxu0 %v941
    %954 = vmatpush.bf16.msra.mxu0 %v940
    %955 = vmatpush.bf16.msra.mxu0 %v939
    %956 = vmatpush.bf16.msra.mxu0 %v938
    %957 = vmatmul.bf16.gmra.mxu0 %v947
    %v958 = vpop.f32.mrf.mxu0
    %v959 = vadd.f32 %v920, %v958
    %v960 = vpop.f32.mrf.mxu0
    %v961 = vadd.f32 %v920, %v960
    %962 = vdwg.mxu0
    %v963 = vadd.f32 %v959, %v851
    %v964 = vadd.f32 %v961, %v852
    %v965 = vld [vmem:[#allocation15] sm:$0x1]
    %v966 = vld [vmem:[#allocation16] sm:$0x1]
    %v967 = vsel %vm363, %v963, 0.0
    %968 = vadd.xlane.f32.xlu0 %v967
    %v969 = vpop.xlane.xlu0 %968
    %v970 = vsel %vm363, %v964, 0.0
    %971 = vadd.xlane.f32.xlu0 %v970
    %v972 = vpop.xlane.xlu0 %971
    %v973 = vmul.f32 %v969, %v376
    %v974 = vmul.f32 %v972, %v376
    %v975 = vsub.f32 %v963, %v973
    %v976 = vsub.f32 %v964, %v974
    %v977 = vmul.f32 %v975, %v975
    %v978 = vmul.f32 %v976, %v976
    %v979 = vsel %vm363, %v977, 0.0
    %980 = vadd.xlane.f32.xlu0 %v979
    %v981 = vpop.xlane.xlu0 %980
    %v982 = vsel %vm363, %v978, 0.0
    %983 = vadd.xlane.f32.xlu0 %v982
    %v984 = vpop.xlane.xlu0 %983
    %v985 = vmul.f32 %v981, %v376
    %v986 = vmul.f32 %v984, %v376
    %v987 = vadd.f32 %v985, 1e-12
    %v988 = vadd.f32 %v986, 1e-12
    %v989 = vrsqrt.pop %v987
    %v990 = vmul.f32 %v989, %v987
    %v991 = vmul.f32 %v990, %v989
    %v992 = vmul.f32 0.5, %v991
    %v993 = vsub.f32 1.5, %v992
    %v994 = vmul.f32 %v989, %v993
    %vm995 = vweird.f32 %v987
    %vm996 = vweird.f32 %v989
    %vm997 = vmor %vm995, %vm996
    %v998 = vsel %vm997, %v989, %v994
    %v999 = vrsqrt.pop %v988
    %v1000 = vmul.f32 %v999, %v988
    %v1001 = vmul.f32 %v1000, %v999
    %v1002 = vmul.f32 0.5, %v1001
    %v1003 = vsub.f32 1.5, %v1002
    %v1004 = vmul.f32 %v999, %v1003
    %vm1005 = vweird.f32 %v988
    %vm1006 = vweird.f32 %v999
    %vm1007 = vmor %vm1005, %vm1006
    %v1008 = vsel %vm1007, %v999, %v1004
    %v1009 = vmul.f32 %v975, %v998
    %v1010 = vmul.f32 %v976, %v1008
    %v1012 = vperm.slane %v965, 0
    %v1014 = vmul.f32 %v1009, %v1012
    %v1015 = vmul.f32 %v1010, %v1012
    %v1017 = vperm.slane %v966, 0
    %v1019 = vadd.f32 %v1014, %v1017
    %v1020 = vadd.f32 %v1015, %v1017
    %v1021 = vpack.c.bf16 %v1020, %v1019
    %s1022 = scalar_lea.vmem [#allocation6], 96
    %v1023 = vld [vmem:[%s1022] sm:$0xff]
    %v1024 = vld [vmem:[%s1022 + $0x8] sm:$0xff]
    %v1025 = vld [vmem:[%s1022 + $0x10] sm:$0xff]
    %v1026 = vld [vmem:[%s1022 + $0x18] sm:$0xff]
    %v1027 = vld [vmem:[%s1022 + $0x20] sm:$0xff]
    %v1028 = vld [vmem:[%s1022 + $0x28] sm:$0xff]
    %v1029 = vld [vmem:[%s1022 + $0x30] sm:$0xff]
    %v1030 = vld [vmem:[%s1022 + $0x38] sm:$0xff]
    %v1031 = vld [vmem:[%s1022 + $0x40] sm:$0xff]
    %v1032 = vld [vmem:[%s1022 + $0x48] sm:$0xff]
    %v1033 = vld [vmem:[%s1022 + $0x50] sm:$0xff]
    %v1034 = vld [vmem:[%s1022 + $0x58] sm:$0xff]
    %s1035 = scalar_lea.vmem %s8, 6
    %v1036 = vld [vmem:[%s1035] sm:$0x3f]
    %v1038 = vperm.slane %v1036, 0
    %v1039 = vperm.slane %v1036, 1
    %v1040 = vperm.slane %v1036, 2
    %v1041 = vperm.slane %v1036, 3
    %v1042 = vperm.slane %v1036, 4
    %v1043 = vperm.slane %v1036, 5
    %v1062 = vunpack.c.l.b16 %v1023
    %v1063 = vunpack.c.h.b16 %v1023
    %v1064 = vunpack.c.l.b16 %v1024
    %v1065 = vunpack.c.h.b16 %v1024
    %v1066 = vunpack.c.l.b16 %v1025
    %v1067 = vunpack.c.h.b16 %v1025
    %v1068 = vunpack.c.l.b16 %v1026
    %v1069 = vunpack.c.h.b16 %v1026
    %v1070 = vunpack.c.l.b16 %v1027
    %v1071 = vunpack.c.h.b16 %v1027
    %v1072 = vunpack.c.l.b16 %v1028
    %v1073 = vunpack.c.h.b16 %v1028
    %v1074 = vunpack.c.l.b16 %v1029
    %v1075 = vunpack.c.h.b16 %v1029
    %v1076 = vunpack.c.l.b16 %v1030
    %v1077 = vunpack.c.h.b16 %v1030
    %v1078 = vunpack.c.l.b16 %v1031
    %v1079 = vunpack.c.h.b16 %v1031
    %v1080 = vunpack.c.l.b16 %v1032
    %v1081 = vunpack.c.h.b16 %v1032
    %v1082 = vunpack.c.l.b16 %v1033
    %v1083 = vunpack.c.h.b16 %v1033
    %v1084 = vunpack.c.l.b16 %v1034
    %v1085 = vunpack.c.h.b16 %v1034
    %v1086 = vpack.c.b16 %v1068, %v1062
    %v1087 = vpack.c.b16 %v1069, %v1063
    %v1088 = vpack.c.b16 %v1070, %v1064
    %v1089 = vpack.c.b16 %v1071, %v1065
    %v1090 = vpack.c.b16 %v1072, %v1066
    %v1091 = vpack.c.b16 %v1073, %v1067
    %v1092 = vpack.c.b16 %v1080, %v1074
    %v1093 = vpack.c.b16 %v1081, %v1075
    %v1094 = vpack.c.b16 %v1082, %v1076
    %v1095 = vpack.c.b16 %v1083, %v1077
    %v1096 = vpack.c.b16 %v1084, %v1078
    %v1097 = vpack.c.b16 %v1085, %v1079
    %v1111 = vsel %vm363, %v1021, 0
    %1113 = vmatpush.bf16.msra.mxu0 0
    %1114 = vmatpush.bf16.msra.mxu0 0
    %1115 = vmatpush.bf16.msra.mxu0 0
    %1116 = vmatpush.bf16.msra.mxu0 0
    %1117 = vmatpush.bf16.msra.mxu0 0
    %1118 = vmatpush.bf16.msra.mxu0 0
    %1119 = vmatpush.bf16.msra.mxu0 %v1092
    %1120 = vmatpush.bf16.msra.mxu0 %v1086
    %1121 = vmatmul.bf16.gmra.mxu0 %v1111
    %v1122 = vpop.f32.mrf.mxu0
    %v1123 = vadd.f32 %v1038, %v1122
    %v1124 = vpop.f32.mrf.mxu0
    %v1125 = vadd.f32 %v1038, %v1124
    %1126 = vdwg.mxu0
    %1127 = vmatpush.bf16.msra.mxu0 0
    %1128 = vmatpush.bf16.msra.mxu0 0
    %1129 = vmatpush.bf16.msra.mxu0 0
    %1130 = vmatpush.bf16.msra.mxu0 0
    %1131 = vmatpush.bf16.msra.mxu0 0
    %1132 = vmatpush.bf16.msra.mxu0 0
    %1133 = vmatpush.bf16.msra.mxu0 %v1093
    %1134 = vmatpush.bf16.msra.mxu0 %v1087
    %1135 = vmatmul.bf16.gmra.mxu0 %v1111
    %v1136 = vpop.f32.mrf.mxu0
    %v1137 = vadd.f32 %v1039, %v1136
    %v1138 = vpop.f32.mrf.mxu0
    %v1139 = vadd.f32 %v1039, %v1138
    %1140 = vdwg.mxu0
    %1141 = vmatpush.bf16.msra.mxu0 0
    %1142 = vmatpush.bf16.msra.mxu0 0
    %1143 = vmatpush.bf16.msra.mxu0 0
    %1144 = vmatpush.bf16.msra.mxu0 0
    %1145 = vmatpush.bf16.msra.mxu0 0
    %1146 = vmatpush.bf16.msra.mxu0 0
    %1147 = vmatpush.bf16.msra.mxu0 %v1094
    %1148 = vmatpush.bf16.msra.mxu0 %v1088
    %1149 = vmatmul.bf16.gmra.mxu0 %v1111
    %v1150 = vpop.f32.mrf.mxu0
    %v1151 = vadd.f32 %v1040, %v1150
    %v1152 = vpop.f32.mrf.mxu0
    %v1153 = vadd.f32 %v1040, %v1152
    %1154 = vdwg.mxu0
    %1155 = vmatpush.bf16.msra.mxu0 0
    %1156 = vmatpush.bf16.msra.mxu0 0
    %1157 = vmatpush.bf16.msra.mxu0 0
    %1158 = vmatpush.bf16.msra.mxu0 0
    %1159 = vmatpush.bf16.msra.mxu0 0
    %1160 = vmatpush.bf16.msra.mxu0 0
    %1161 = vmatpush.bf16.msra.mxu0 %v1095
    %1162 = vmatpush.bf16.msra.mxu0 %v1089
    %1163 = vmatmul.bf16.gmra.mxu0 %v1111
    %v1164 = vpop.f32.mrf.mxu0
    %v1165 = vadd.f32 %v1041, %v1164
    %v1166 = vpop.f32.mrf.mxu0
    %v1167 = vadd.f32 %v1041, %v1166
    %1168 = vdwg.mxu0
    %1169 = vmatpush.bf16.msra.mxu0 0
    %1170 = vmatpush.bf16.msra.mxu0 0
    %1171 = vmatpush.bf16.msra.mxu0 0
    %1172 = vmatpush.bf16.msra.mxu0 0
    %1173 = vmatpush.bf16.msra.mxu0 0
    %1174 = vmatpush.bf16.msra.mxu0 0
    %1175 = vmatpush.bf16.msra.mxu0 %v1096
    %1176 = vmatpush.bf16.msra.mxu0 %v1090
    %1177 = vmatmul.bf16.gmra.mxu0 %v1111
    %v1178 = vpop.f32.mrf.mxu0
    %v1179 = vadd.f32 %v1042, %v1178
    %v1180 = vpop.f32.mrf.mxu0
    %v1181 = vadd.f32 %v1042, %v1180
    %1182 = vdwg.mxu0
    %1183 = vmatpush.bf16.msra.mxu0 0
    %1184 = vmatpush.bf16.msra.mxu0 0
    %1185 = vmatpush.bf16.msra.mxu0 0
    %1186 = vmatpush.bf16.msra.mxu0 0
    %1187 = vmatpush.bf16.msra.mxu0 0
    %1188 = vmatpush.bf16.msra.mxu0 0
    %1189 = vmatpush.bf16.msra.mxu0 %v1097
    %1190 = vmatpush.bf16.msra.mxu0 %v1091
    %1191 = vmatmul.bf16.gmra.mxu0 %v1111
    %v1192 = vpop.f32.mrf.mxu0
    %v1193 = vadd.f32 %v1043, %v1192
    %v1194 = vpop.f32.mrf.mxu0
    %v1195 = vadd.f32 %v1043, %v1194
    %1196 = vdwg.mxu0
    %s1197 = scalar_lea.vmem %s9, 16
    %v1198 = vld [vmem:[%s1197] sm:$0xf]
    %v1199 = vld [vmem:[%s1197 + $0x4] sm:$0xf]
    %v1200 = vld [vmem:[%s1197 + $0x8] sm:$0xf]
    %v1201 = vld [vmem:[%s1197 + $0xc] sm:$0xf]
    %v1202 = vpack.c.bf16 %v1125, %v1123
    %v1203 = vpack.c.bf16 %v1153, %v1151
    %v1204 = vpack.c.bf16 %v1181, %v1179
    %v1206 = vsel %vm617, %v1202, 0
    %v1209 = vsel %vm617, %v1203, 0
    %1211 = vmatpush.bf16.xpose.msra.mxu0 0
    %1212 = vmatpush.bf16.xpose.msra.mxu0 0
    %1213 = vmatpush.bf16.xpose.msra.mxu0 0
    %1214 = vmatpush.bf16.xpose.msra.mxu0 0
    %1215 = vmatpush.bf16.xpose.msra.mxu0 0
    %1216 = vmatpush.bf16.xpose.msra.mxu0 0
    %1217 = vmatpush.bf16.xpose.msra.mxu0 0
    %1218 = vmatpush.bf16.xpose.msra.mxu0 %v1209
    %1219 = vmatmul.bf16.gmra.mxu0 %v1206
    %v1220 = vpop.f32.mrf.mxu0
    %v1221 = vadd.f32 %v434, %v1220
    %v1222 = vpop.f32.mrf.mxu0
    %v1223 = vadd.f32 %v435, %v1222
    %1224 = vdwg.mxu0
    %v1225 = vsel %vm617, %v1221, -inf
    %1226 = vmax.xlane.f32.xlu0 %v1225
    %v1227 = vpop.xlane.xlu0 %1226
    %v1228 = vsel %vm617, %v1223, -inf
    %1229 = vmax.xlane.f32.xlu0 %v1228
    %v1230 = vpop.xlane.xlu0 %1229
    %v1231 = vsub.f32 %v1221, %v1227
    %v1232 = vsub.f32 %v1223, %v1230
    %v1233 = vmul.f32 %v1231, 1.442695
    %v1234 = vpow.pop %v1233
    %v1235 = vmul.f32 %v1232, 1.442695
    %v1236 = vpow.pop %v1235
    %v1237 = vsel %vm617, %v1234, 0.0
    %1238 = vadd.xlane.f32.xlu0 %v1237
    %v1239 = vpop.xlane.xlu0 %1238
    %v1240 = vsel %vm617, %v1236, 0.0
    %1241 = vadd.xlane.f32.xlu0 %v1240
    %v1242 = vpop.xlane.xlu0 %1241
    %v1243 = vrcp.pop %v1239
    %v1244 = vrcp.pop %v1242
    %v1245 = vmul.f32 %v1234, %v1243
    %v1246 = vmul.f32 %v1236, %v1244
    %v1247 = vpack.c.bf16 %v1246, %v1245
    %v1249 = vsel %vm617, %v1247, 0
    %1251 = vmatpush.bf16.msra.mxu0 0
    %1252 = vmatpush.bf16.msra.mxu0 0
    %1253 = vmatpush.bf16.msra.mxu0 0
    %1254 = vmatpush.bf16.msra.mxu0 0
    %1255 = vmatpush.bf16.msra.mxu0 0
    %1256 = vmatpush.bf16.msra.mxu0 0
    %1257 = vmatpush.bf16.msra.mxu0 0
    %1258 = vmatpush.bf16.msra.mxu0 %v1204
    %1259 = vmatmul.bf16.gmra.mxu0 %v1249
    %v1260 = vpop.f32.mrf.mxu0
    %v1261 = vadd.f32 0.0, %v1260
    %v1262 = vpop.f32.mrf.mxu0
    %v1263 = vadd.f32 0.0, %v1262
    %1264 = vdwg.mxu0
    %v1265 = vpack.c.bf16 %v1263, %v1261
    %v1266 = vpack.c.bf16 %v1139, %v1137
    %v1267 = vpack.c.bf16 %v1167, %v1165
    %v1268 = vpack.c.bf16 %v1195, %v1193
    %v1270 = vsel %vm617, %v1266, 0
    %v1273 = vsel %vm617, %v1267, 0
    %1275 = vmatpush.bf16.xpose.msra.mxu0 0
    %1276 = vmatpush.bf16.xpose.msra.mxu0 0
    %1277 = vmatpush.bf16.xpose.msra.mxu0 0
    %1278 = vmatpush.bf16.xpose.msra.mxu0 0
    %1279 = vmatpush.bf16.xpose.msra.mxu0 0
    %1280 = vmatpush.bf16.xpose.msra.mxu0 0
    %1281 = vmatpush.bf16.xpose.msra.mxu0 0
    %1282 = vmatpush.bf16.xpose.msra.mxu0 %v1273
    %1283 = vmatmul.bf16.gmra.mxu0 %v1270
    %v1284 = vpop.f32.mrf.mxu0
    %v1285 = vadd.f32 %v434, %v1284
    %v1286 = vpop.f32.mrf.mxu0
    %v1287 = vadd.f32 %v435, %v1286
    %1288 = vdwg.mxu0
    %v1289 = vsel %vm617, %v1285, -inf
    %1290 = vmax.xlane.f32.xlu0 %v1289
    %v1291 = vpop.xlane.xlu0 %1290
    %v1292 = vsel %vm617, %v1287, -inf
    %1293 = vmax.xlane.f32.xlu0 %v1292
    %v1294 = vpop.xlane.xlu0 %1293
    %v1295 = vsub.f32 %v1285, %v1291
    %v1296 = vsub.f32 %v1287, %v1294
    %v1297 = vmul.f32 %v1295, 1.442695
    %v1298 = vpow.pop %v1297
    %v1299 = vmul.f32 %v1296, 1.442695
    %v1300 = vpow.pop %v1299
    %v1301 = vsel %vm617, %v1298, 0.0
    %1302 = vadd.xlane.f32.xlu0 %v1301
    %v1303 = vpop.xlane.xlu0 %1302
    %v1304 = vsel %vm617, %v1300, 0.0
    %1305 = vadd.xlane.f32.xlu0 %v1304
    %v1306 = vpop.xlane.xlu0 %1305
    %v1307 = vrcp.pop %v1303
    %v1308 = vrcp.pop %v1306
    %v1309 = vmul.f32 %v1298, %v1307
    %v1310 = vmul.f32 %v1300, %v1308
    %v1311 = vpack.c.bf16 %v1310, %v1309
    %v1313 = vsel %vm617, %v1311, 0
    %1315 = vmatpush.bf16.msra.mxu0 0
    %1316 = vmatpush.bf16.msra.mxu0 0
    %1317 = vmatpush.bf16.msra.mxu0 0
    %1318 = vmatpush.bf16.msra.mxu0 0
    %1319 = vmatpush.bf16.msra.mxu0 0
    %1320 = vmatpush.bf16.msra.mxu0 0
    %1321 = vmatpush.bf16.msra.mxu0 0
    %1322 = vmatpush.bf16.msra.mxu0 %v1268
    %1323 = vmatmul.bf16.gmra.mxu0 %v1313
    %v1324 = vpop.f32.mrf.mxu0
    %v1325 = vadd.f32 0.0, %v1324
    %v1326 = vpop.f32.mrf.mxu0
    %v1327 = vadd.f32 0.0, %v1326
    %1328 = vdwg.mxu0
    %v1329 = vpack.c.bf16 %v1327, %v1325
    %v1332 = vunpack.c.l.b16 %v1200
    %v1333 = vunpack.c.l.b16 %v1201
    %v1334 = vpack.c.b16 %v1333, %v1332
    %v1337 = vsel %vm617, %v1329, 0
    %1339 = vmatpush.bf16.msra.mxu0 0
    %1340 = vmatpush.bf16.msra.mxu0 0
    %1341 = vmatpush.bf16.msra.mxu0 0
    %1342 = vmatpush.bf16.msra.mxu0 0
    %1343 = vmatpush.bf16.msra.mxu0 0
    %1344 = vmatpush.bf16.msra.mxu0 0
    %1345 = vmatpush.bf16.msra.mxu0 0
    %1346 = vmatpush.bf16.msra.mxu0 %v1334
    %1347 = vmatmul.bf16.gmra.mxu0 %v1337
    %v1348 = vpop.f32.mrf.mxu0
    %v1349 = vadd.f32 0.0, %v1348
    %v1350 = vpop.f32.mrf.mxu0
    %v1351 = vadd.f32 0.0, %v1350
    %1352 = vdwg.mxu0
    %v1355 = vunpack.c.l.b16 %v1198
    %v1356 = vunpack.c.l.b16 %v1199
    %v1357 = vpack.c.b16 %v1356, %v1355
    %v1360 = vsel %vm617, %v1265, 0
    %1362 = vmatpush.bf16.msra.mxu0 0
    %1363 = vmatpush.bf16.msra.mxu0 0
    %1364 = vmatpush.bf16.msra.mxu0 0
    %1365 = vmatpush.bf16.msra.mxu0 0
    %1366 = vmatpush.bf16.msra.mxu0 0
    %1367 = vmatpush.bf16.msra.mxu0 0
    %1368 = vmatpush.bf16.msra.mxu0 0
    %1369 = vmatpush.bf16.msra.mxu0 %v1357
    %1370 = vmatmul.bf16.gmra.mxu0 %v1360
    %v1371 = vpop.f32.mrf.mxu0
    %v1372 = vadd.f32 %v1349, %v1371
    %v1373 = vpop.f32.mrf.mxu0
    %v1374 = vadd.f32 %v1351, %v1373
    %1375 = vdwg.mxu0
    %s1376 = scalar_lea.vmem [#allocation7], 1
    %v1377 = vld [vmem:[%s1376] sm:$0x1]
    %v1379 = vperm.slane %v1377, 0
    %v1381 = vadd.f32 %v1372, %v1379
    %v1382 = vadd.f32 %v1374, %v1379
    %v1383 = vadd.f32 %v1381, %v1019
    %v1384 = vadd.f32 %v1382, %v1020
    %s1385 = scalar_lea.vmem [#allocation9], 1
    %v1386 = vld [vmem:[%s1385] sm:$0x1]
    %s1387 = scalar_lea.vmem [#allocation10], 1
    %v1388 = vld [vmem:[%s1387] sm:$0x1]
    %v1389 = vsel %vm363, %v1383, 0.0
    %1390 = vadd.xlane.f32.xlu0 %v1389
    %v1391 = vpop.xlane.xlu0 %1390
    %v1392 = vsel %vm363, %v1384, 0.0
    %1393 = vadd.xlane.f32.xlu0 %v1392
    %v1394 = vpop.xlane.xlu0 %1393
    %v1395 = vmul.f32 %v1391, %v376
    %v1396 = vmul.f32 %v1394, %v376
    %v1397 = vsub.f32 %v1383, %v1395
    %v1398 = vsub.f32 %v1384, %v1396
    %v1399 = vmul.f32 %v1397, %v1397
    %v1400 = vmul.f32 %v1398, %v1398
    %v1401 = vsel %vm363, %v1399, 0.0
    %1402 = vadd.xlane.f32.xlu0 %v1401
    %v1403 = vpop.xlane.xlu0 %1402
    %v1404 = vsel %vm363, %v1400, 0.0
    %1405 = vadd.xlane.f32.xlu0 %v1404
    %v1406 = vpop.xlane.xlu0 %1405
    %v1407 = vmul.f32 %v1403, %v376
    %v1408 = vmul.f32 %v1406, %v376
    %v1409 = vadd.f32 %v1407, 1e-12
    %v1410 = vadd.f32 %v1408, 1e-12
    %v1411 = vrsqrt.pop %v1409
    %v1412 = vmul.f32 %v1411, %v1409
    %v1413 = vmul.f32 %v1412, %v1411
    %v1414 = vmul.f32 0.5, %v1413
    %v1415 = vsub.f32 1.5, %v1414
    %v1416 = vmul.f32 %v1411, %v1415
    %vm1417 = vweird.f32 %v1409
    %vm1418 = vweird.f32 %v1411
    %vm1419 = vmor %vm1417, %vm1418
    %v1420 = vsel %vm1419, %v1411, %v1416
    %v1421 = vrsqrt.pop %v1410
    %v1422 = vmul.f32 %v1421, %v1410
    %v1423 = vmul.f32 %v1422, %v1421
    %v1424 = vmul.f32 0.5, %v1423
    %v1425 = vsub.f32 1.5, %v1424
    %v1426 = vmul.f32 %v1421, %v1425
    %vm1427 = vweird.f32 %v1410
    %vm1428 = vweird.f32 %v1421
    %vm1429 = vmor %vm1427, %vm1428
    %v1430 = vsel %vm1429, %v1421, %v1426
    %v1431 = vmul.f32 %v1397, %v1420
    %v1432 = vmul.f32 %v1398, %v1430
    %v1434 = vperm.slane %v1386, 0
    %v1436 = vmul.f32 %v1431, %v1434
    %v1437 = vmul.f32 %v1432, %v1434
    %v1439 = vperm.slane %v1388, 0
    %v1441 = vadd.f32 %v1436, %v1439
    %v1442 = vadd.f32 %v1437, %v1439
    %v1443 = vpack.c.bf16 %v1442, %v1441
    %s1444 = scalar_lea.vmem %s13, 16
    %v1445 = vld [vmem:[%s1444] sm:$0xf]
    %v1446 = vld [vmem:[%s1444 + $0x4] sm:$0xf]
    %v1447 = vld [vmem:[%s1444 + $0x8] sm:$0xf]
    %v1448 = vld [vmem:[%s1444 + $0xc] sm:$0xf]
    %s1449 = scalar_lea.vmem [#allocation12], 1
    %v1450 = vld [vmem:[%s1449] sm:$0x1]
    %v1452 = vperm.slane %v1450, 0
    %v1458 = vunpack.c.l.b16 %v1445
    %v1459 = vunpack.c.l.b16 %v1446
    %v1460 = vunpack.c.l.b16 %v1447
    %v1461 = vunpack.c.l.b16 %v1448
    %v1462 = vpack.c.b16 %v1459, %v1458
    %v1463 = vpack.c.b16 %v1461, %v1460
    %v1467 = vsel %vm363, %v1443, 0
    %1469 = vmatpush.bf16.msra.mxu0 0
    %1470 = vmatpush.bf16.msra.mxu0 0
    %1471 = vmatpush.bf16.msra.mxu0 0
    %1472 = vmatpush.bf16.msra.mxu0 0
    %1473 = vmatpush.bf16.msra.mxu0 0
    %1474 = vmatpush.bf16.msra.mxu0 0
    %1475 = vmatpush.bf16.msra.mxu0 %v1463
    %1476 = vmatpush.bf16.msra.mxu0 %v1462
    %1477 = vmatmul.bf16.gmra.mxu0 %v1467
    %v1478 = vpop.f32.mrf.mxu0
    %v1479 = vadd.f32 %v1452, %v1478
    %v1480 = vpop.f32.mrf.mxu0
    %v1481 = vadd.f32 %v1452, %v1480
    %1482 = vdwg.mxu0
    %v1483 = vmul.f32 %v1479, %v1479
    %v1484 = vmul.f32 %v1481, %v1481
    %v1485 = vmul.f32 %v1479, %v1483
    %v1486 = vmul.f32 %v1481, %v1484
    %v1487 = vmul.f32 %v1485, 0.044715
    %v1488 = vmul.f32 %v1486, 0.044715
    %v1489 = vadd.f32 %v1479, %v1487
    %v1490 = vadd.f32 %v1481, %v1488
    %v1491 = vmul.f32 %v1489, 0.7978846
    %v1492 = vmul.f32 %v1490, 0.7978846
    %v1493 = vtanh.pop %v1491
    %v1494 = vtanh.pop %v1492
    %v1495 = vadd.f32 %v1493, 1.0
    %v1496 = vadd.f32 %v1494, 1.0
    %v1497 = vmul.f32 %v1495, 0.5
    %v1498 = vmul.f32 %v1496, 0.5
    %v1499 = vmul.f32 %v1479, %v1497
    %v1500 = vmul.f32 %v1481, %v1498
    %v1501 = vpack.c.bf16 %v1500, %v1499
    %s1502 = scalar_lea.vmem %s15, 32
    %v1503 = vld [vmem:[%s1502] sm:$0xf]
    %v1504 = vld [vmem:[%s1502 + $0x4] sm:$0xf]
    %v1505 = vld [vmem:[%s1502 + $0x8] sm:$0xf]
    %v1506 = vld [vmem:[%s1502 + $0xc] sm:$0xf]
    %v1507 = vld [vmem:[%s1502 + $0x10] sm:$0xf]
    %v1508 = vld [vmem:[%s1502 + $0x14] sm:$0xf]
    %v1509 = vld [vmem:[%s1502 + $0x18] sm:$0xf]
    %v1510 = vld [vmem:[%s1502 + $0x1c] sm:$0xf]
    %s1511 = scalar_lea.vmem [#allocation13], 1
    %v1512 = vld [vmem:[%s1511] sm:$0x1]
    %v1514 = vperm.slane %v1512, 0
    %v1524 = vunpack.c.l.b16 %v1503
    %v1525 = vunpack.c.l.b16 %v1504
    %v1526 = vunpack.c.l.b16 %v1505
    %v1527 = vunpack.c.l.b16 %v1506
    %v1528 = vunpack.c.l.b16 %v1507
    %v1529 = vunpack.c.l.b16 %v1508
    %v1530 = vunpack.c.l.b16 %v1509
    %v1531 = vunpack.c.l.b16 %v1510
    %v1532 = vpack.c.b16 %v1525, %v1524
    %v1533 = vpack.c.b16 %v1527, %v1526
    %v1534 = vpack.c.b16 %v1529, %v1528
    %v1535 = vpack.c.b16 %v1531, %v1530
    %v1541 = vsel %vm343, %v1501, 0
    %1543 = vmatpush.bf16.msra.mxu0 0
    %1544 = vmatpush.bf16.msra.mxu0 0
    %1545 = vmatpush.bf16.msra.mxu0 0
    %1546 = vmatpush.bf16.msra.mxu0 0
    %1547 = vmatpush.bf16.msra.mxu0 %v1535
    %1548 = vmatpush.bf16.msra.mxu0 %v1534
    %1549 = vmatpush.bf16.msra.mxu0 %v1533
    %1550 = vmatpush.bf16.msra.mxu0 %v1532
    %1551 = vmatmul.bf16.gmra.mxu0 %v1541
    %v1552 = vpop.f32.mrf.mxu0
    %v1553 = vadd.f32 %v1514, %v1552
    %v1554 = vpop.f32.mrf.mxu0
    %v1555 = vadd.f32 %v1514, %v1554
    %1556 = vdwg.mxu0
    %v1557 = vadd.f32 %v1553, %v1441
    %v1558 = vadd.f32 %v1555, %v1442
    %s1559 = scalar_lea.vmem [#allocation15], 1
    %v1560 = vld [vmem:[%s1559] sm:$0x1]
    %s1561 = scalar_lea.vmem [#allocation16], 1
    %v1562 = vld [vmem:[%s1561] sm:$0x1]
    %v1563 = vsel %vm363, %v1557, 0.0
    %1564 = vadd.xlane.f32.xlu0 %v1563
    %v1565 = vpop.xlane.xlu0 %1564
    %v1566 = vsel %vm363, %v1558, 0.0
    %1567 = vadd.xlane.f32.xlu0 %v1566
    %v1568 = vpop.xlane.xlu0 %1567
    %v1569 = vmul.f32 %v1565, %v376
    %v1570 = vmul.f32 %v1568, %v376
    %v1571 = vsub.f32 %v1557, %v1569
    %v1572 = vsub.f32 %v1558, %v1570
    %v1573 = vmul.f32 %v1571, %v1571
    %v1574 = vmul.f32 %v1572, %v1572
    %v1575 = vsel %vm363, %v1573, 0.0
    %1576 = vadd.xlane.f32.xlu0 %v1575
    %v1577 = vpop.xlane.xlu0 %1576
    %v1578 = vsel %vm363, %v1574, 0.0
    %1579 = vadd.xlane.f32.xlu0 %v1578
    %v1580 = vpop.xlane.xlu0 %1579
    %v1581 = vmul.f32 %v1577, %v376
    %v1582 = vmul.f32 %v1580, %v376
    %v1583 = vadd.f32 %v1581, 1e-12
    %v1584 = vadd.f32 %v1582, 1e-12
    %v1585 = vrsqrt.pop %v1583
    %v1586 = vmul.f32 %v1585, %v1583
    %v1587 = vmul.f32 %v1586, %v1585
    %v1588 = vmul.f32 0.5, %v1587
    %v1589 = vsub.f32 1.5, %v1588
    %v1590 = vmul.f32 %v1585, %v1589
    %vm1591 = vweird.f32 %v1583
    %vm1592 = vweird.f32 %v1585
    %vm1593 = vmor %vm1591, %vm1592
    %v1594 = vsel %vm1593, %v1585, %v1590
    %v1595 = vrsqrt.pop %v1584
    %v1596 = vmul.f32 %v1595, %v1584
    %v1597 = vmul.f32 %v1596, %v1595
    %v1598 = vmul.f32 0.5, %v1597
    %v1599 = vsub.f32 1.5, %v1598
    %v1600 = vmul.f32 %v1595, %v1599
    %vm1601 = vweird.f32 %v1584
    %vm1602 = vweird.f32 %v1595
    %vm1603 = vmor %vm1601, %vm1602
    %v1604 = vsel %vm1603, %v1595, %v1600
    %v1605 = vmul.f32 %v1571, %v1594
    %v1606 = vmul.f32 %v1572, %v1604
    %v1608 = vperm.slane %v1560, 0
    %v1610 = vmul.f32 %v1605, %v1608
    %v1611 = vmul.f32 %v1606, %v1608
    %v1613 = vperm.slane %v1562, 0
    %v1615 = vadd.f32 %v1610, %v1613
    %v1616 = vadd.f32 %v1611, %v1613
    %v1617 = vpack.c.bf16 %v1616, %v1615
    %v1618 = vld [vmem:[%s19] sm:$0xf]
    %v1619 = vld [vmem:[%s19 + $0x4] sm:$0xf]
    %v1620 = vld [vmem:[%s19 + $0x8] sm:$0xf]
    %v1621 = vld [vmem:[%s19 + $0xc] sm:$0xf]
    %v1622 = vld [vmem:[%s20] sm:$0x1]
    %v1624 = vperm.slane %v1622, 0
    %v1630 = vunpack.c.l.b16 %v1618
    %v1631 = vunpack.c.l.b16 %v1619
    %v1632 = vunpack.c.l.b16 %v1620
    %v1633 = vunpack.c.l.b16 %v1621
    %v1634 = vpack.c.b16 %v1631, %v1630
    %v1635 = vpack.c.b16 %v1633, %v1632
    %v1639 = vsel %vm363, %v1617, 0
    %1641 = vmatpush.bf16.msra.mxu0 0
    %1642 = vmatpush.bf16.msra.mxu0 0
    %1643 = vmatpush.bf16.msra.mxu0 0
    %1644 = vmatpush.bf16.msra.mxu0 0
    %1645 = vmatpush.bf16.msra.mxu0 0
    %1646 = vmatpush.bf16.msra.mxu0 0
    %1647 = vmatpush.bf16.msra.mxu0 %v1635
    %1648 = vmatpush.bf16.msra.mxu0 %v1634
    %1649 = vmatmul.bf16.gmra.mxu0 %v1639
    %v1650 = vpop.f32.mrf.mxu0
    %v1651 = vadd.f32 %v1624, %v1650
    %v1652 = vpop.f32.mrf.mxu0
    %v1653 = vadd.f32 %v1624, %v1652
    %1654 = vdwg.mxu0
    %v1655 = vmul.f32 %v1651, %v1651
    %v1656 = vmul.f32 %v1653, %v1653
    %v1657 = vmul.f32 %v1651, %v1655
    %v1658 = vmul.f32 %v1653, %v1656
    %v1659 = vmul.f32 %v1657, 0.044715
    %v1660 = vmul.f32 %v1658, 0.044715
    %v1661 = vadd.f32 %v1651, %v1659
    %v1662 = vadd.f32 %v1653, %v1660
    %v1663 = vmul.f32 %v1661, 0.7978846
    %v1664 = vmul.f32 %v1662, 0.7978846
    %v1665 = vtanh.pop %v1663
    %v1666 = vtanh.pop %v1664
    %v1667 = vadd.f32 %v1665, 1.0
    %v1668 = vadd.f32 %v1666, 1.0
    %v1669 = vmul.f32 %v1667, 0.5
    %v1670 = vmul.f32 %v1668, 0.5
    %v1671 = vmul.f32 %v1651, %v1669
    %v1672 = vmul.f32 %v1653, %v1670
    %v1673 = vld [vmem:[%s21] sm:$0x1]
    %v1674 = vld [vmem:[#allocation18] sm:$0x1]
    %v1675 = vsel %vm363, %v1671, 0.0
    %1676 = vadd.xlane.f32.xlu0 %v1675
    %v1677 = vpop.xlane.xlu0 %1676
    %v1678 = vsel %vm363, %v1672, 0.0
    %1679 = vadd.xlane.f32.xlu0 %v1678
    %v1680 = vpop.xlane.xlu0 %1679
    %v1681 = vmul.f32 %v1677, %v376
    %v1682 = vmul.f32 %v1680, %v376
    %v1683 = vsub.f32 %v1671, %v1681
    %v1684 = vsub.f32 %v1672, %v1682
    %v1685 = vmul.f32 %v1683, %v1683
    %v1686 = vmul.f32 %v1684, %v1684
    %v1687 = vsel %vm363, %v1685, 0.0
    %1688 = vadd.xlane.f32.xlu0 %v1687
    %v1689 = vpop.xlane.xlu0 %1688
    %v1690 = vsel %vm363, %v1686, 0.0
    %1691 = vadd.xlane.f32.xlu0 %v1690
    %v1692 = vpop.xlane.xlu0 %1691
    %v1693 = vmul.f32 %v1689, %v376
    %v1694 = vmul.f32 %v1692, %v376
    %v1695 = vadd.f32 %v1693, 1e-12
    %v1696 = vadd.f32 %v1694, 1e-12
    %v1697 = vrsqrt.pop %v1695
    %v1698 = vmul.f32 %v1697, %v1695
    %v1699 = vmul.f32 %v1698, %v1697
    %v1700 = vmul.f32 0.5, %v1699
    %v1701 = vsub.f32 1.5, %v1700
    %v1702 = vmul.f32 %v1697, %v1701
    %vm1703 = vweird.f32 %v1695
    %vm1704 = vweird.f32 %v1697
    %vm1705 = vmor %vm1703, %vm1704
    %v1706 = vsel %vm1705, %v1697, %v1702
    %v1707 = vrsqrt.pop %v1696
    %v1708 = vmul.f32 %v1707, %v1696
    %v1709 = vmul.f32 %v1708, %v1707
    %v1710 = vmul.f32 0.5, %v1709
    %v1711 = vsub.f32 1.5, %v1710
    %v1712 = vmul.f32 %v1707, %v1711
    %vm1713 = vweird.f32 %v1696
    %vm1714 = vweird.f32 %v1707
    %vm1715 = vmor %vm1713, %vm1714
    %v1716 = vsel %vm1715, %v1707, %v1712
    %v1717 = vmul.f32 %v1683, %v1706
    %v1718 = vmul.f32 %v1684, %v1716
    %v1720 = vperm.slane %v1673, 0
    %v1722 = vmul.f32 %v1717, %v1720
    %v1723 = vmul.f32 %v1718, %v1720
    %v1725 = vperm.slane %v1674, 0
    %v1727 = vadd.f32 %v1722, %v1725
    %v1728 = vadd.f32 %v1723, %v1725
    %v1729 = vpack.c.bf16 %v1728, %v1727
    %v1730 = vld [vmem:[#allocation19] sm:$0xf]
    %v1731 = vld [vmem:[#allocation19 + $0x4] sm:$0xf]
    %v1732 = vld [vmem:[#allocation19 + $0x8] sm:$0xf]
    %v1733 = vld [vmem:[#allocation19 + $0xc] sm:$0xf]
    %v1734 = vld [vmem:[#allocation21] sm:$0xf]
    %v1735 = vld [vmem:[#allocation21 + $0x4] sm:$0xf]
    %v1736 = vld [vmem:[#allocation21 + $0x8] sm:$0xf]
    %v1737 = vld [vmem:[#allocation21 + $0xc] sm:$0xf]
    %v1742 = vunpack.c.l.b16 %v1734
    %v1743 = vunpack.c.l.b16 %v1735
    %v1744 = vunpack.c.l.b16 %v1736
    %v1745 = vunpack.c.l.b16 %v1737
    %v1746 = vpack.c.b16 %v1743, %v1742
    %v1747 = vpack.c.b16 %v1745, %v1744
    %1750 = vmatpush.bf16.msra.mxu0 0
    %1751 = vmatpush.bf16.msra.mxu0 0
    %1752 = vmatpush.bf16.msra.mxu0 0
    %1753 = vmatpush.bf16.msra.mxu0 0
    %1754 = vmatpush.bf16.msra.mxu0 0
    %1755 = vmatpush.bf16.msra.mxu0 0
    %1756 = vmatpush.bf16.msra.mxu0 %v1747
    %1757 = vmatpush.bf16.msra.mxu0 %v1746
    %1758 = vmatmul.bf16.gmra.mxu0 %v1639
    %v1759 = vpop.f32.mrf.mxu0
    %v1760 = vadd.f32 0.0, %v1759
    %v1761 = vpop.f32.mrf.mxu0
    %v1762 = vadd.f32 0.0, %v1761
    %1763 = vdwg.mxu0
    %v1768 = vunpack.c.l.b16 %v1730
    %v1769 = vunpack.c.l.b16 %v1731
    %v1770 = vunpack.c.l.b16 %v1732
    %v1771 = vunpack.c.l.b16 %v1733
    %v1772 = vpack.c.b16 %v1769, %v1768
    %v1773 = vpack.c.b16 %v1771, %v1770
    %v1777 = vsel %vm363, %v1729, 0
    %1779 = vmatpush.bf16.msra.mxu0 0
    %1780 = vmatpush.bf16.msra.mxu0 0
    %1781 = vmatpush.bf16.msra.mxu0 0
    %1782 = vmatpush.bf16.msra.mxu0 0
    %1783 = vmatpush.bf16.msra.mxu0 0
    %1784 = vmatpush.bf16.msra.mxu0 0
    %1785 = vmatpush.bf16.msra.mxu0 %v1773
    %1786 = vmatpush.bf16.msra.mxu0 %v1772
    %1787 = vmatmul.bf16.gmra.mxu0 %v1777
    %v1788 = vpop.f32.mrf.mxu0
    %v1789 = vadd.f32 %v1760, %v1788
    %v1790 = vpop.f32.mrf.mxu0
    %v1791 = vadd.f32 %v1762, %v1790
    %1792 = vdwg.mxu0
    %v1793 = vld [vmem:[#allocation22] sm:$0x1]
    %v1795 = vperm.slane %v1793, 0
    %v1797 = vadd.f32 %v1789, %v1795
    %v1798 = vadd.f32 %v1791, %v1795
    %1799 = vst [vmem:[%s26] sm:$0xff] %v1797
    %1800 = vst [vmem:[%s26 + $0x8] sm:$0xff] %v1798
    // Predicated region
    $region162: #{csc_forward.1} parent=1 // pred_check
      _
    $region163: #{csc_forward.1} parent=1 // pred_check_branch
      %1802 = sbr.rel (0) target = $region165
    $region164: #{csc_forward.1} parent=1 // pred_region
      _
    $region165: #{csc_forward.1} parent=1 // pred_fallthru
      _
    // Predicated region
    $region166: #{csc_forward.1} parent=1 // pred_check
      _
    $region167: #{csc_forward.1} parent=1 // pred_check_branch
      %1804 = sbr.rel (0) target = $region169
    $region168: #{csc_forward.1} parent=1 // pred_region
      _
    $region169: #{csc_forward.1} parent=1 // pred_fallthru
      _
    %1805 = vsyncpa [#allocation3], 1
    %1806 = vsyncpa [#allocation5], 1
    %1807 = vsyncpa [#allocation8], 1
    %1808 = vsyncpa [#allocation11], 1
    %1809 = vsyncpa [#allocation14], 1
    %1810 = vsyncpa [#allocation17], 1
    %1811 = vsyncpa [#allocation20], 1
    %1812 = vsyncpa [#allocation23], 1

</llo_original>
